<compile_context>
chip_gen: v7x
topology: tpu7x:2x2x1
jax: 0.10.0
libtpu: 0.0.40
codegen_flags: <defaults>
</compile_context>

<pallas_src>
import functools

import jax
import jax.numpy as jnp
import numpy as np
from jax.experimental import pallas as pl
from jax.experimental.pallas import tpu as pltpu

EPS = 1e-5
_MXU_MIN_CIN = 32   # below this, 1x1 convs run as unrolled VPU FMAs instead of MXU


def _parallel_block_kernel(
    xp_ref, w_eff_ref, b_eff_ref,
    w00_ref, b00_ref, w01_ref, b01_ref,
    w10_ref, b10_ref, w11_ref, b11_ref,
    g1_ref, be1_ref, g2_ref, be2_ref, g3_ref, be3_ref,
    out_ref,
    *, H, W, Wp, L,
):
    C = xp_ref.shape[0]           # (C, Fin) padded flat input, one sample
    Cout = out_ref.shape[0]       # (Cout, Fout) lane-dense output slab
    Fout = H * Wp
    f32 = jnp.float32

    # ---- column-validity mask (junk columns x >= W), built in-kernel -------------
    col = jax.lax.broadcasted_iota(jnp.int32, (1, Wp), 1)
    mask_row = (col < W).astype(f32)                       # (1, Wp)
    mask = mask_row if H == 1 else jnp.concatenate([mask_row] * H, axis=1)  # (1, Fout)

    # ---- fused depthwise conv: large + small + identity folded into one LxL ------
    # One wide row load per dy; dx taps are static value slices of that row.
    acc = None
    for dy in range(L):
        row = xp_ref[:, pl.ds(dy * Wp, Fout + (L - 1))].astype(f32)   # (C, Fout+L-1)
        for dx in range(L):
            t = row[:, dx:dx + Fout] * w_eff_ref[dy * L + dx]         # (C,Fout)*(C,1)
            acc = t if acc is None else acc + t
    acc = acc + b_eff_ref[...]                                         # (C, Fout)

    # ---- single-pass masked GroupNorm --------------------------------------------
    def group_norm(v, gamma, beta, groups):
        c = v.shape[0]
        cpg = c // groups
        inv_n = 1.0 / float(cpg * H * W)
        vm = v * mask                                     # junk columns -> 0
        s1 = jnp.sum(vm, axis=1, keepdims=True)           # (c, 1)  sum(x)
        s2 = jnp.sum(vm * v, axis=1, keepdims=True)        # (c, 1)  sum(x^2), one pass
        scales, shifts = [], []
        for g in range(groups):                            # tiny static per-group combine
            sl = slice(g * cpg, (g + 1) * cpg)
            mean = jnp.sum(s1[sl], axis=0, keepdims=True) * inv_n          # (1, 1)
            ex2 = jnp.sum(s2[sl], axis=0, keepdims=True) * inv_n           # (1, 1)
            inv_std = jax.lax.rsqrt(ex2 - mean * mean + EPS)               # (1, 1)
            sc = gamma[sl] * inv_std                                       # (cpg, 1)
            scales.append(sc)
            shifts.append(beta[sl] - mean * sc)                            # (cpg, 1)
        scale = scales[0] if groups == 1 else jnp.concatenate(scales, axis=0)
        shift = shifts[0] if groups == 1 else jnp.concatenate(shifts, axis=0)
        return v * scale + shift                           # one fused normalize pass

    # ---- 1x1 conv: single 2-D matmul (MXU, bf16) or unrolled VPU FMAs ------------
    def conv1x1(w_ref, b_ref, v):
        co, ci = w_ref.shape
        w = w_ref[...].astype(f32)
        if ci >= _MXU_MIN_CIN:
            y = jnp.dot(w.astype(jnp.bfloat16), v.astype(jnp.bfloat16),
                        preferred_element_type=jnp.float32)
        else:
            y = None
            for cc in range(ci):                           # rank-1 FMA per input channel
                t = w[:, cc:cc + 1] * v[cc:cc + 1, :]      # (co,1)*(1,Fout) -> (co,Fout)
                y = t if y is None else y + t
        return y + b_ref[...]

    gi = max(C // 4, 1)
    go = max(Cout // 4, 1)

    # x = relu(norm1(conv_L(x) + conv_S(x) + x))
    h = jnp.maximum(group_norm(acc, g1_ref[...], be1_ref[...], gi), 0.0)
    # x = relu(norm2(x + conv01(conv00(x))))
    y = conv1x1(w01_ref, b01_ref, conv1x1(w00_ref, b00_ref, h))
    h = jnp.maximum(group_norm(h + y, g2_ref[...], be2_ref[...], gi), 0.0)
    # x = norm3(conv11(conv10(x)))
    y = conv1x1(w11_ref, b11_ref, conv1x1(w10_ref, b10_ref, h))
    out_ref[...] = group_norm(y, g3_ref[...], be3_ref[...], go).astype(out_ref.dtype)


def parallel_block_forward(x, params, *, large_kernel, small_kernel):
    """x: (B, C, H, W) float32, NCHW (same as PyTorch).  stride must be 1."""
    B, C, H, W = x.shape
    Cout = params["w11"].shape[0]
    L, S = large_kernel, small_kernel
    assert S <= L and L % 2 == 1 and S % 2 == 1, "odd kernels with S <= L expected"
    pL, pS = L // 2, S // 2

    # padded row width: smallest Wp >= W + 2*pL with H*Wp % 128 == 0 (bounded junk)
    Wp_min = W + 2 * pL
    Wp = Wp_min
    for extra in range(128):
        if (H * (Wp_min + extra)) % 128 == 0:
            if extra <= max(32, Wp_min):
                Wp = Wp_min + extra
            break
    Fout = H * Wp
    Fin = (H + 2 * pL + 1) * Wp          # +1 slack row keeps the last tap window in bounds

    # single padded copy of the input, flattened lane-dense
    xp = jnp.pad(x, ((0, 0), (0, 0), (pL, pL + 1), (pL, Wp - W - pL))).reshape(B, C, Fin)

    # fuse large dwconv + small dwconv + identity into one effective LxL dwconv
    w_eff = params["wL"]
    w_eff = w_eff.at[:, pL - pS:pL + pS + 1, pL - pS:pL + pS + 1].add(params["wS"])
    w_eff = w_eff.at[:, pL, pL].add(1.0)
    w_eff = w_eff.transpose(1, 2, 0).reshape(L * L, C, 1)     # tap (dy,dx) -> row dy*L+dx
    b_eff = params["bL"] + params["bS"]

    flat_params = [
        w_eff, b_eff,
        params["w00"], params["b00"], params["w01"], params["b01"],
        params["w10"], params["b10"], params["w11"], params["b11"],
        params["g1"], params["be1"], params["g2"], params["be2"],
        params["g3"], params["be3"],
    ]

    def rep_spec(a):
        nd = a.ndim
        return pl.BlockSpec(a.shape, lambda b, nd=nd: (0,) * nd)

    in_specs = [pl.BlockSpec((None, C, Fin), lambda b: (b, 0, 0))] \
        + [rep_spec(p) for p in flat_params]
    out_spec = pl.BlockSpec((None, Cout, Fout), lambda b: (b, 0, 0))

    kernel = functools.partial(_parallel_block_kernel, H=H, W=W, Wp=Wp, L=L)

    # VMEM budget: ~3/4 of physical, capped at 96 MiB (=> 48 MiB on v7x's 64 MiB).
    try:
        info = pltpu.get_tpu_info()
        vmem_limit = min(int(getattr(info, "vmem_capacity_bytes", 64 << 20)) * 3 // 4,
                         96 << 20)
    except Exception:
        vmem_limit = 48 << 20

    out_flat = pl.pallas_call(
        kernel,
        out_shape=jax.ShapeDtypeStruct((B, Cout, Fout), jnp.float32),
        grid_spec=pltpu.PrefetchScalarGridSpec(
            num_scalar_prefetch=0,
            grid=(B,),
            in_specs=in_specs,
            out_specs=out_spec,
        ),
        compiler_params=pltpu.CompilerParams(
            dimension_semantics=("parallel",),
            vmem_limit_bytes=vmem_limit,
        ),
    )(xp, *flat_params)

    # strip padded junk columns and restore NCHW outside the kernel (cheap XLA ops)
    return out_flat.reshape(B, Cout, H, Wp)[:, :, :, :W]


# ----------------------- pure-JAX reference (for checking) -----------------------
def _ref_group_norm(x, gamma, beta, groups):
    B, C, H, W = x.shape
    xr = x.reshape(B, groups, -1)
    mean = xr.mean(axis=2, keepdims=True)
    var = ((xr - mean) ** 2).mean(axis=2, keepdims=True)
    xn = ((xr - mean) / jnp.sqrt(var + EPS)).reshape(B, C, H, W)
    return xn * gamma.reshape(1, C, 1, 1) + beta.reshape(1, C, 1, 1)


def _ref_dwconv(x, w, b, pad):
    C = x.shape[1]
    y = jax.lax.conv_general_dilated(
        x, w.reshape(C, 1, w.shape[1], w.shape[2]),
        window_strides=(1, 1), padding=[(pad, pad), (pad, pad)],
        dimension_numbers=("NCHW", "OIHW", "NCHW"), feature_group_count=C)
    return y + b.reshape(1, -1, 1, 1)


def _ref_1x1(x, w, b):
    return jnp.einsum("oc,bchw->bohw", w, x) + b.reshape(1, -1, 1, 1)


def parallel_block_reference(x, p, *, large_kernel, small_kernel):
    C = x.shape[1]
    Cout = p["w11"].shape[0]
    x1 = _ref_dwconv(x, p["wL"], p["bL"], large_kernel // 2)
    x2 = _ref_dwconv(x, p["wS"], p["bS"], small_kernel // 2)
    h = jax.nn.relu(_ref_group_norm(x1 + x2 + x, p["g1"], p["be1"], max(C // 4, 1)))
    h2 = _ref_1x1(_ref_1x1(h, p["w00"], p["b00"]), p["w01"], p["b01"])
    h = jax.nn.relu(_ref_group_norm(h + h2, p["g2"], p["be2"], max(C // 4, 1)))
    h3 = _ref_1x1(_ref_1x1(h, p["w10"], p["b10"]), p["w11"], p["b11"])
    return _ref_group_norm(h3, p["g3"], p["be3"], max(Cout // 4, 1))


# ----------------------- deterministic parameter init -----------------------
def make_params(key, in_channels, out_channels, large_kernel, small_kernel):
    cmid = int(in_channels * 1.5)
    ks = jax.random.split(key, 12)
    nrm = lambda k, s: (0.1 * jax.random.normal(k, s, jnp.float32))
    return {
        "wL": nrm(ks[0], (in_channels, large_kernel, large_kernel)),
        "bL": nrm(ks[1], (in_channels, 1)),
        "wS": nrm(ks[2], (in_channels, small_kernel, small_kernel)),
        "bS": nrm(ks[3], (in_channels, 1)),
        "w00": nrm(ks[4], (cmid, in_channels)),
        "b00": nrm(ks[5], (cmid, 1)),
        "w01": nrm(ks[6], (in_channels, cmid)),
        "b01": nrm(ks[7], (in_channels, 1)),
        "w10": nrm(ks[8], (cmid, in_channels)),
        "b10": nrm(ks[9], (cmid, 1)),
        "w11": nrm(ks[10], (out_channels, cmid)),
        "b11": nrm(ks[11], (out_channels, 1)),
        # GroupNorm affine params: PyTorch default init (gamma=1, beta=0)
        "g1": jnp.ones((in_channels, 1), jnp.float32),
        "be1": jnp.zeros((in_channels, 1), jnp.float32),
        "g2": jnp.ones((in_channels, 1), jnp.float32),
        "be2": jnp.zeros((in_channels, 1), jnp.float32),
        "g3": jnp.ones((out_channels, 1), jnp.float32),
        "be3": jnp.zeros((out_channels, 1), jnp.float32),
    }


if __name__ == "__main__":
    # stride=1 is required for the residual x1 + x2 + x to be shape-consistent.
    B, C_IN, C_OUT, H, W = 2, 4, 8, 16, 16
    LARGE_K, SMALL_K = 5, 3

    key = jax.random.PRNGKey(0)
    kx, kp = jax.random.split(key)
    x = jax.random.normal(kx, (B, C_IN, H, W), jnp.float32)
    params = make_params(kp, C_IN, C_OUT, LARGE_K, SMALL_K)

    fwd = functools.partial(parallel_block_forward,
                            large_kernel=LARGE_K, small_kernel=SMALL_K)
    out = jax.jit(lambda a: fwd(a, params))(x)
    out = jax.block_until_ready(out)

    ref = parallel_block_reference(x, params,
                                   large_kernel=LARGE_K, small_kernel=SMALL_K)
    np.testing.assert_allclose(np.asarray(out), np.asarray(ref),
                               rtol=2e-4, atol=2e-4)
    print("KERNEL_OK")
</pallas_src>

<mosaic_0001>
module attributes {stable_mosaic.version = 11 : i64} {
  func.func @_parallel_block_kernel(%arg0: i32, %arg1: memref<1x4x504xf32, #tpu.memory_space<vmem>>, %arg2: memref<25x4x1xf32, #tpu.memory_space<vmem>>, %arg3: memref<4x1xf32, #tpu.memory_space<vmem>>, %arg4: memref<6x4xf32, #tpu.memory_space<vmem>>, %arg5: memref<6x1xf32, #tpu.memory_space<vmem>>, %arg6: memref<4x6xf32, #tpu.memory_space<vmem>>, %arg7: memref<4x1xf32, #tpu.memory_space<vmem>>, %arg8: memref<6x4xf32, #tpu.memory_space<vmem>>, %arg9: memref<6x1xf32, #tpu.memory_space<vmem>>, %arg10: memref<8x6xf32, #tpu.memory_space<vmem>>, %arg11: memref<8x1xf32, #tpu.memory_space<vmem>>, %arg12: memref<4x1xf32, #tpu.memory_space<vmem>>, %arg13: memref<4x1xf32, #tpu.memory_space<vmem>>, %arg14: memref<4x1xf32, #tpu.memory_space<vmem>>, %arg15: memref<4x1xf32, #tpu.memory_space<vmem>>, %arg16: memref<8x1xf32, #tpu.memory_space<vmem>>, %arg17: memref<8x1xf32, #tpu.memory_space<vmem>>, %arg18: memref<1x8x384xf32, #tpu.memory_space<vmem>>) attributes {dimension_semantics = [#tpu.dimension_semantics<parallel>], iteration_bounds = array<i64: 2>, scalar_prefetch = 0 : i64, scratch_operands = 0 : i64, tpu.core_type = #tpu.core_type<tc>, window_params = [{transform_indices = @transform_0, window_bounds = array<i64: 1, 4, 504>}, {pipeline_mode = #tpu.pipeline_mode<synchronous>, transform_indices = @transform_1, window_bounds = array<i64: 25, 4, 1>}, {pipeline_mode = #tpu.pipeline_mode<synchronous>, transform_indices = @transform_2, window_bounds = array<i64: 4, 1>}, {pipeline_mode = #tpu.pipeline_mode<synchronous>, transform_indices = @transform_3, window_bounds = array<i64: 6, 4>}, {pipeline_mode = #tpu.pipeline_mode<synchronous>, transform_indices = @transform_4, window_bounds = array<i64: 6, 1>}, {pipeline_mode = #tpu.pipeline_mode<synchronous>, transform_indices = @transform_5, window_bounds = array<i64: 4, 6>}, {pipeline_mode = #tpu.pipeline_mode<synchronous>, transform_indices = @transform_6, window_bounds = array<i64: 4, 1>}, {pipeline_mode = #tpu.pipeline_mode<synchronous>, transform_indices = @transform_7, window_bounds = array<i64: 6, 4>}, {pipeline_mode = #tpu.pipeline_mode<synchronous>, transform_indices = @transform_8, window_bounds = array<i64: 6, 1>}, {pipeline_mode = #tpu.pipeline_mode<synchronous>, transform_indices = @transform_9, window_bounds = array<i64: 8, 6>}, {pipeline_mode = #tpu.pipeline_mode<synchronous>, transform_indices = @transform_10, window_bounds = array<i64: 8, 1>}, {pipeline_mode = #tpu.pipeline_mode<synchronous>, transform_indices = @transform_11, window_bounds = array<i64: 4, 1>}, {pipeline_mode = #tpu.pipeline_mode<synchronous>, transform_indices = @transform_12, window_bounds = array<i64: 4, 1>}, {pipeline_mode = #tpu.pipeline_mode<synchronous>, transform_indices = @transform_13, window_bounds = array<i64: 4, 1>}, {pipeline_mode = #tpu.pipeline_mode<synchronous>, transform_indices = @transform_14, window_bounds = array<i64: 4, 1>}, {pipeline_mode = #tpu.pipeline_mode<synchronous>, transform_indices = @transform_15, window_bounds = array<i64: 8, 1>}, {pipeline_mode = #tpu.pipeline_mode<synchronous>, transform_indices = @transform_16, window_bounds = array<i64: 8, 1>}, {transform_indices = @transform_17, window_bounds = array<i64: 1, 8, 384>}]} {
    %0 = tpu.iota {dimensions = array<i32: 1>} : vector<1x24xi32>
    %c16_i32 = arith.constant 16 : i32
    %1 = vector.broadcast %c16_i32 : i32 to vector<1x24xi32>
    %2 = arith.cmpi slt, %0, %1 : vector<1x24xi32>
    %3 = arith.extui %2 : vector<1x24xi1> to vector<1x24xi32>
    %4 = arith.sitofp %3 : vector<1x24xi32> to vector<1x24xf32>
    %5 = tpu.concatenate %4, %4, %4, %4, %4, %4, %4, %4, %4, %4, %4, %4, %4, %4, %4, %4 in 1 : vector<1x24xf32>, vector<1x24xf32>, vector<1x24xf32>, vector<1x24xf32>, vector<1x24xf32>, vector<1x24xf32>, vector<1x24xf32>, vector<1x24xf32>, vector<1x24xf32>, vector<1x24xf32>, vector<1x24xf32>, vector<1x24xf32>, vector<1x24xf32>, vector<1x24xf32>, vector<1x24xf32>, vector<1x24xf32> -> vector<1x384xf32>
    %c0 = arith.constant 0 : index
    %c0_0 = arith.constant 0 : index
    %c0_1 = arith.constant 0 : index
    %6 = vector.load %arg1[%c0, %c0_0, %c0_1] : memref<1x4x504xf32, #tpu.memory_space<vmem>>, vector<1x4x388xf32>
    %7 = vector.shape_cast %6 : vector<1x4x388xf32> to vector<4x388xf32>
    %8 = vector.extract_strided_slice %7 {offsets = [0, 0], sizes = [4, 384], strides = [1, 1]} : vector<4x388xf32> to vector<4x384xf32>
    %c0_2 = arith.constant 0 : index
    %c0_3 = arith.constant 0 : index
    %c0_4 = arith.constant 0 : index
    %9 = vector.load %arg2[%c0_2, %c0_3, %c0_4] : memref<25x4x1xf32, #tpu.memory_space<vmem>>, vector<1x4x1xf32>
    %10 = vector.shape_cast %9 : vector<1x4x1xf32> to vector<4x1xf32>
    %11 = vector.broadcast %10 : vector<4x1xf32> to vector<4x384xf32>
    %12 = arith.mulf %8, %11 : vector<4x384xf32>
    %13 = vector.extract_strided_slice %7 {offsets = [0, 1], sizes = [4, 384], strides = [1, 1]} : vector<4x388xf32> to vector<4x384xf32>
    %c1 = arith.constant 1 : index
    %c0_5 = arith.constant 0 : index
    %c0_6 = arith.constant 0 : index
    %14 = vector.load %arg2[%c1, %c0_5, %c0_6] : memref<25x4x1xf32, #tpu.memory_space<vmem>>, vector<1x4x1xf32>
    %15 = vector.shape_cast %14 : vector<1x4x1xf32> to vector<4x1xf32>
    %16 = vector.broadcast %15 : vector<4x1xf32> to vector<4x384xf32>
    %17 = arith.mulf %13, %16 : vector<4x384xf32>
    %18 = arith.addf %12, %17 : vector<4x384xf32>
    %19 = vector.extract_strided_slice %7 {offsets = [0, 2], sizes = [4, 384], strides = [1, 1]} : vector<4x388xf32> to vector<4x384xf32>
    %c2 = arith.constant 2 : index
    %c0_7 = arith.constant 0 : index
    %c0_8 = arith.constant 0 : index
    %20 = vector.load %arg2[%c2, %c0_7, %c0_8] : memref<25x4x1xf32, #tpu.memory_space<vmem>>, vector<1x4x1xf32>
    %21 = vector.shape_cast %20 : vector<1x4x1xf32> to vector<4x1xf32>
    %22 = vector.broadcast %21 : vector<4x1xf32> to vector<4x384xf32>
    %23 = arith.mulf %19, %22 : vector<4x384xf32>
    %24 = arith.addf %18, %23 : vector<4x384xf32>
    %25 = vector.extract_strided_slice %7 {offsets = [0, 3], sizes = [4, 384], strides = [1, 1]} : vector<4x388xf32> to vector<4x384xf32>
    %c3 = arith.constant 3 : index
    %c0_9 = arith.constant 0 : index
    %c0_10 = arith.constant 0 : index
    %26 = vector.load %arg2[%c3, %c0_9, %c0_10] : memref<25x4x1xf32, #tpu.memory_space<vmem>>, vector<1x4x1xf32>
    %27 = vector.shape_cast %26 : vector<1x4x1xf32> to vector<4x1xf32>
    %28 = vector.broadcast %27 : vector<4x1xf32> to vector<4x384xf32>
    %29 = arith.mulf %25, %28 : vector<4x384xf32>
    %30 = arith.addf %24, %29 : vector<4x384xf32>
    %31 = vector.extract_strided_slice %7 {offsets = [0, 4], sizes = [4, 384], strides = [1, 1]} : vector<4x388xf32> to vector<4x384xf32>
    %c4 = arith.constant 4 : index
    %c0_11 = arith.constant 0 : index
    %c0_12 = arith.constant 0 : index
    %32 = vector.load %arg2[%c4, %c0_11, %c0_12] : memref<25x4x1xf32, #tpu.memory_space<vmem>>, vector<1x4x1xf32>
    %33 = vector.shape_cast %32 : vector<1x4x1xf32> to vector<4x1xf32>
    %34 = vector.broadcast %33 : vector<4x1xf32> to vector<4x384xf32>
    %35 = arith.mulf %31, %34 : vector<4x384xf32>
    %36 = arith.addf %30, %35 : vector<4x384xf32>
    %c0_13 = arith.constant 0 : index
    %c0_14 = arith.constant 0 : index
    %c24 = arith.constant 24 : index
    %37 = vector.load %arg1[%c0_13, %c0_14, %c24] : memref<1x4x504xf32, #tpu.memory_space<vmem>>, vector<1x4x388xf32>
    %38 = vector.shape_cast %37 : vector<1x4x388xf32> to vector<4x388xf32>
    %39 = vector.extract_strided_slice %38 {offsets = [0, 0], sizes = [4, 384], strides = [1, 1]} : vector<4x388xf32> to vector<4x384xf32>
    %c5 = arith.constant 5 : index
    %c0_15 = arith.constant 0 : index
    %c0_16 = arith.constant 0 : index
    %40 = vector.load %arg2[%c5, %c0_15, %c0_16] : memref<25x4x1xf32, #tpu.memory_space<vmem>>, vector<1x4x1xf32>
    %41 = vector.shape_cast %40 : vector<1x4x1xf32> to vector<4x1xf32>
    %42 = vector.broadcast %41 : vector<4x1xf32> to vector<4x384xf32>
    %43 = arith.mulf %39, %42 : vector<4x384xf32>
    %44 = arith.addf %36, %43 : vector<4x384xf32>
    %45 = vector.extract_strided_slice %38 {offsets = [0, 1], sizes = [4, 384], strides = [1, 1]} : vector<4x388xf32> to vector<4x384xf32>
    %c6 = arith.constant 6 : index
    %c0_17 = arith.constant 0 : index
    %c0_18 = arith.constant 0 : index
    %46 = vector.load %arg2[%c6, %c0_17, %c0_18] : memref<25x4x1xf32, #tpu.memory_space<vmem>>, vector<1x4x1xf32>
    %47 = vector.shape_cast %46 : vector<1x4x1xf32> to vector<4x1xf32>
    %48 = vector.broadcast %47 : vector<4x1xf32> to vector<4x384xf32>
    %49 = arith.mulf %45, %48 : vector<4x384xf32>
    %50 = arith.addf %44, %49 : vector<4x384xf32>
    %51 = vector.extract_strided_slice %38 {offsets = [0, 2], sizes = [4, 384], strides = [1, 1]} : vector<4x388xf32> to vector<4x384xf32>
    %c7 = arith.constant 7 : index
    %c0_19 = arith.constant 0 : index
    %c0_20 = arith.constant 0 : index
    %52 = vector.load %arg2[%c7, %c0_19, %c0_20] : memref<25x4x1xf32, #tpu.memory_space<vmem>>, vector<1x4x1xf32>
    %53 = vector.shape_cast %52 : vector<1x4x1xf32> to vector<4x1xf32>
    %54 = vector.broadcast %53 : vector<4x1xf32> to vector<4x384xf32>
    %55 = arith.mulf %51, %54 : vector<4x384xf32>
    %56 = arith.addf %50, %55 : vector<4x384xf32>
    %57 = vector.extract_strided_slice %38 {offsets = [0, 3], sizes = [4, 384], strides = [1, 1]} : vector<4x388xf32> to vector<4x384xf32>
    %c8 = arith.constant 8 : index
    %c0_21 = arith.constant 0 : index
    %c0_22 = arith.constant 0 : index
    %58 = vector.load %arg2[%c8, %c0_21, %c0_22] : memref<25x4x1xf32, #tpu.memory_space<vmem>>, vector<1x4x1xf32>
    %59 = vector.shape_cast %58 : vector<1x4x1xf32> to vector<4x1xf32>
    %60 = vector.broadcast %59 : vector<4x1xf32> to vector<4x384xf32>
    %61 = arith.mulf %57, %60 : vector<4x384xf32>
    %62 = arith.addf %56, %61 : vector<4x384xf32>
    %63 = vector.extract_strided_slice %38 {offsets = [0, 4], sizes = [4, 384], strides = [1, 1]} : vector<4x388xf32> to vector<4x384xf32>
    %c9 = arith.constant 9 : index
    %c0_23 = arith.constant 0 : index
    %c0_24 = arith.constant 0 : index
    %64 = vector.load %arg2[%c9, %c0_23, %c0_24] : memref<25x4x1xf32, #tpu.memory_space<vmem>>, vector<1x4x1xf32>
    %65 = vector.shape_cast %64 : vector<1x4x1xf32> to vector<4x1xf32>
    %66 = vector.broadcast %65 : vector<4x1xf32> to vector<4x384xf32>
    %67 = arith.mulf %63, %66 : vector<4x384xf32>
    %68 = arith.addf %62, %67 : vector<4x384xf32>
    %c0_25 = arith.constant 0 : index
    %c0_26 = arith.constant 0 : index
    %c48 = arith.constant 48 : index
    %69 = vector.load %arg1[%c0_25, %c0_26, %c48] : memref<1x4x504xf32, #tpu.memory_space<vmem>>, vector<1x4x388xf32>
    %70 = vector.shape_cast %69 : vector<1x4x388xf32> to vector<4x388xf32>
    %71 = vector.extract_strided_slice %70 {offsets = [0, 0], sizes = [4, 384], strides = [1, 1]} : vector<4x388xf32> to vector<4x384xf32>
    %c10 = arith.constant 10 : index
    %c0_27 = arith.constant 0 : index
    %c0_28 = arith.constant 0 : index
    %72 = vector.load %arg2[%c10, %c0_27, %c0_28] : memref<25x4x1xf32, #tpu.memory_space<vmem>>, vector<1x4x1xf32>
    %73 = vector.shape_cast %72 : vector<1x4x1xf32> to vector<4x1xf32>
    %74 = vector.broadcast %73 : vector<4x1xf32> to vector<4x384xf32>
    %75 = arith.mulf %71, %74 : vector<4x384xf32>
    %76 = arith.addf %68, %75 : vector<4x384xf32>
    %77 = vector.extract_strided_slice %70 {offsets = [0, 1], sizes = [4, 384], strides = [1, 1]} : vector<4x388xf32> to vector<4x384xf32>
    %c11 = arith.constant 11 : index
    %c0_29 = arith.constant 0 : index
    %c0_30 = arith.constant 0 : index
    %78 = vector.load %arg2[%c11, %c0_29, %c0_30] : memref<25x4x1xf32, #tpu.memory_space<vmem>>, vector<1x4x1xf32>
    %79 = vector.shape_cast %78 : vector<1x4x1xf32> to vector<4x1xf32>
    %80 = vector.broadcast %79 : vector<4x1xf32> to vector<4x384xf32>
    %81 = arith.mulf %77, %80 : vector<4x384xf32>
    %82 = arith.addf %76, %81 : vector<4x384xf32>
    %83 = vector.extract_strided_slice %70 {offsets = [0, 2], sizes = [4, 384], strides = [1, 1]} : vector<4x388xf32> to vector<4x384xf32>
    %c12 = arith.constant 12 : index
    %c0_31 = arith.constant 0 : index
    %c0_32 = arith.constant 0 : index
    %84 = vector.load %arg2[%c12, %c0_31, %c0_32] : memref<25x4x1xf32, #tpu.memory_space<vmem>>, vector<1x4x1xf32>
    %85 = vector.shape_cast %84 : vector<1x4x1xf32> to vector<4x1xf32>
    %86 = vector.broadcast %85 : vector<4x1xf32> to vector<4x384xf32>
    %87 = arith.mulf %83, %86 : vector<4x384xf32>
    %88 = arith.addf %82, %87 : vector<4x384xf32>
    %89 = vector.extract_strided_slice %70 {offsets = [0, 3], sizes = [4, 384], strides = [1, 1]} : vector<4x388xf32> to vector<4x384xf32>
    %c13 = arith.constant 13 : index
    %c0_33 = arith.constant 0 : index
    %c0_34 = arith.constant 0 : index
    %90 = vector.load %arg2[%c13, %c0_33, %c0_34] : memref<25x4x1xf32, #tpu.memory_space<vmem>>, vector<1x4x1xf32>
    %91 = vector.shape_cast %90 : vector<1x4x1xf32> to vector<4x1xf32>
    %92 = vector.broadcast %91 : vector<4x1xf32> to vector<4x384xf32>
    %93 = arith.mulf %89, %92 : vector<4x384xf32>
    %94 = arith.addf %88, %93 : vector<4x384xf32>
    %95 = vector.extract_strided_slice %70 {offsets = [0, 4], sizes = [4, 384], strides = [1, 1]} : vector<4x388xf32> to vector<4x384xf32>
    %c14 = arith.constant 14 : index
    %c0_35 = arith.constant 0 : index
    %c0_36 = arith.constant 0 : index
    %96 = vector.load %arg2[%c14, %c0_35, %c0_36] : memref<25x4x1xf32, #tpu.memory_space<vmem>>, vector<1x4x1xf32>
    %97 = vector.shape_cast %96 : vector<1x4x1xf32> to vector<4x1xf32>
    %98 = vector.broadcast %97 : vector<4x1xf32> to vector<4x384xf32>
    %99 = arith.mulf %95, %98 : vector<4x384xf32>
    %100 = arith.addf %94, %99 : vector<4x384xf32>
    %c0_37 = arith.constant 0 : index
    %c0_38 = arith.constant 0 : index
    %c72 = arith.constant 72 : index
    %101 = vector.load %arg1[%c0_37, %c0_38, %c72] : memref<1x4x504xf32, #tpu.memory_space<vmem>>, vector<1x4x388xf32>
    %102 = vector.shape_cast %101 : vector<1x4x388xf32> to vector<4x388xf32>
    %103 = vector.extract_strided_slice %102 {offsets = [0, 0], sizes = [4, 384], strides = [1, 1]} : vector<4x388xf32> to vector<4x384xf32>
    %c15 = arith.constant 15 : index
    %c0_39 = arith.constant 0 : index
    %c0_40 = arith.constant 0 : index
    %104 = vector.load %arg2[%c15, %c0_39, %c0_40] : memref<25x4x1xf32, #tpu.memory_space<vmem>>, vector<1x4x1xf32>
    %105 = vector.shape_cast %104 : vector<1x4x1xf32> to vector<4x1xf32>
    %106 = vector.broadcast %105 : vector<4x1xf32> to vector<4x384xf32>
    %107 = arith.mulf %103, %106 : vector<4x384xf32>
    %108 = arith.addf %100, %107 : vector<4x384xf32>
    %109 = vector.extract_strided_slice %102 {offsets = [0, 1], sizes = [4, 384], strides = [1, 1]} : vector<4x388xf32> to vector<4x384xf32>
    %c16 = arith.constant 16 : index
    %c0_41 = arith.constant 0 : index
    %c0_42 = arith.constant 0 : index
    %110 = vector.load %arg2[%c16, %c0_41, %c0_42] : memref<25x4x1xf32, #tpu.memory_space<vmem>>, vector<1x4x1xf32>
    %111 = vector.shape_cast %110 : vector<1x4x1xf32> to vector<4x1xf32>
    %112 = vector.broadcast %111 : vector<4x1xf32> to vector<4x384xf32>
    %113 = arith.mulf %109, %112 : vector<4x384xf32>
    %114 = arith.addf %108, %113 : vector<4x384xf32>
    %115 = vector.extract_strided_slice %102 {offsets = [0, 2], sizes = [4, 384], strides = [1, 1]} : vector<4x388xf32> to vector<4x384xf32>
    %c17 = arith.constant 17 : index
    %c0_43 = arith.constant 0 : index
    %c0_44 = arith.constant 0 : index
    %116 = vector.load %arg2[%c17, %c0_43, %c0_44] : memref<25x4x1xf32, #tpu.memory_space<vmem>>, vector<1x4x1xf32>
    %117 = vector.shape_cast %116 : vector<1x4x1xf32> to vector<4x1xf32>
    %118 = vector.broadcast %117 : vector<4x1xf32> to vector<4x384xf32>
    %119 = arith.mulf %115, %118 : vector<4x384xf32>
    %120 = arith.addf %114, %119 : vector<4x384xf32>
    %121 = vector.extract_strided_slice %102 {offsets = [0, 3], sizes = [4, 384], strides = [1, 1]} : vector<4x388xf32> to vector<4x384xf32>
    %c18 = arith.constant 18 : index
    %c0_45 = arith.constant 0 : index
    %c0_46 = arith.constant 0 : index
    %122 = vector.load %arg2[%c18, %c0_45, %c0_46] : memref<25x4x1xf32, #tpu.memory_space<vmem>>, vector<1x4x1xf32>
    %123 = vector.shape_cast %122 : vector<1x4x1xf32> to vector<4x1xf32>
    %124 = vector.broadcast %123 : vector<4x1xf32> to vector<4x384xf32>
    %125 = arith.mulf %121, %124 : vector<4x384xf32>
    %126 = arith.addf %120, %125 : vector<4x384xf32>
    %127 = vector.extract_strided_slice %102 {offsets = [0, 4], sizes = [4, 384], strides = [1, 1]} : vector<4x388xf32> to vector<4x384xf32>
    %c19 = arith.constant 19 : index
    %c0_47 = arith.constant 0 : index
    %c0_48 = arith.constant 0 : index
    %128 = vector.load %arg2[%c19, %c0_47, %c0_48] : memref<25x4x1xf32, #tpu.memory_space<vmem>>, vector<1x4x1xf32>
    %129 = vector.shape_cast %128 : vector<1x4x1xf32> to vector<4x1xf32>
    %130 = vector.broadcast %129 : vector<4x1xf32> to vector<4x384xf32>
    %131 = arith.mulf %127, %130 : vector<4x384xf32>
    %132 = arith.addf %126, %131 : vector<4x384xf32>
    %c0_49 = arith.constant 0 : index
    %c0_50 = arith.constant 0 : index
    %c96 = arith.constant 96 : index
    %133 = vector.load %arg1[%c0_49, %c0_50, %c96] : memref<1x4x504xf32, #tpu.memory_space<vmem>>, vector<1x4x388xf32>
    %134 = vector.shape_cast %133 : vector<1x4x388xf32> to vector<4x388xf32>
    %135 = vector.extract_strided_slice %134 {offsets = [0, 0], sizes = [4, 384], strides = [1, 1]} : vector<4x388xf32> to vector<4x384xf32>
    %c20 = arith.constant 20 : index
    %c0_51 = arith.constant 0 : index
    %c0_52 = arith.constant 0 : index
    %136 = vector.load %arg2[%c20, %c0_51, %c0_52] : memref<25x4x1xf32, #tpu.memory_space<vmem>>, vector<1x4x1xf32>
    %137 = vector.shape_cast %136 : vector<1x4x1xf32> to vector<4x1xf32>
    %138 = vector.broadcast %137 : vector<4x1xf32> to vector<4x384xf32>
    %139 = arith.mulf %135, %138 : vector<4x384xf32>
    %140 = arith.addf %132, %139 : vector<4x384xf32>
    %141 = vector.extract_strided_slice %134 {offsets = [0, 1], sizes = [4, 384], strides = [1, 1]} : vector<4x388xf32> to vector<4x384xf32>
    %c21 = arith.constant 21 : index
    %c0_53 = arith.constant 0 : index
    %c0_54 = arith.constant 0 : index
    %142 = vector.load %arg2[%c21, %c0_53, %c0_54] : memref<25x4x1xf32, #tpu.memory_space<vmem>>, vector<1x4x1xf32>
    %143 = vector.shape_cast %142 : vector<1x4x1xf32> to vector<4x1xf32>
    %144 = vector.broadcast %143 : vector<4x1xf32> to vector<4x384xf32>
    %145 = arith.mulf %141, %144 : vector<4x384xf32>
    %146 = arith.addf %140, %145 : vector<4x384xf32>
    %147 = vector.extract_strided_slice %134 {offsets = [0, 2], sizes = [4, 384], strides = [1, 1]} : vector<4x388xf32> to vector<4x384xf32>
    %c22 = arith.constant 22 : index
    %c0_55 = arith.constant 0 : index
    %c0_56 = arith.constant 0 : index
    %148 = vector.load %arg2[%c22, %c0_55, %c0_56] : memref<25x4x1xf32, #tpu.memory_space<vmem>>, vector<1x4x1xf32>
    %149 = vector.shape_cast %148 : vector<1x4x1xf32> to vector<4x1xf32>
    %150 = vector.broadcast %149 : vector<4x1xf32> to vector<4x384xf32>
    %151 = arith.mulf %147, %150 : vector<4x384xf32>
    %152 = arith.addf %146, %151 : vector<4x384xf32>
    %153 = vector.extract_strided_slice %134 {offsets = [0, 3], sizes = [4, 384], strides = [1, 1]} : vector<4x388xf32> to vector<4x384xf32>
    %c23 = arith.constant 23 : index
    %c0_57 = arith.constant 0 : index
    %c0_58 = arith.constant 0 : index
    %154 = vector.load %arg2[%c23, %c0_57, %c0_58] : memref<25x4x1xf32, #tpu.memory_space<vmem>>, vector<1x4x1xf32>
    %155 = vector.shape_cast %154 : vector<1x4x1xf32> to vector<4x1xf32>
    %156 = vector.broadcast %155 : vector<4x1xf32> to vector<4x384xf32>
    %157 = arith.mulf %153, %156 : vector<4x384xf32>
    %158 = arith.addf %152, %157 : vector<4x384xf32>
    %159 = vector.extract_strided_slice %134 {offsets = [0, 4], sizes = [4, 384], strides = [1, 1]} : vector<4x388xf32> to vector<4x384xf32>
    %c24_59 = arith.constant 24 : index
    %c0_60 = arith.constant 0 : index
    %c0_61 = arith.constant 0 : index
    %160 = vector.load %arg2[%c24_59, %c0_60, %c0_61] : memref<25x4x1xf32, #tpu.memory_space<vmem>>, vector<1x4x1xf32>
    %161 = vector.shape_cast %160 : vector<1x4x1xf32> to vector<4x1xf32>
    %162 = vector.broadcast %161 : vector<4x1xf32> to vector<4x384xf32>
    %163 = arith.mulf %159, %162 : vector<4x384xf32>
    %164 = arith.addf %158, %163 : vector<4x384xf32>
    %c0_62 = arith.constant 0 : index
    %c0_63 = arith.constant 0 : index
    %165 = vector.load %arg3[%c0_62, %c0_63] : memref<4x1xf32, #tpu.memory_space<vmem>>, vector<4x1xf32>
    %166 = vector.broadcast %165 : vector<4x1xf32> to vector<4x384xf32>
    %167 = arith.addf %164, %166 : vector<4x384xf32>
    %c0_64 = arith.constant 0 : index
    %c0_65 = arith.constant 0 : index
    %168 = vector.load %arg12[%c0_64, %c0_65] : memref<4x1xf32, #tpu.memory_space<vmem>>, vector<4x1xf32>
    %c0_66 = arith.constant 0 : index
    %c0_67 = arith.constant 0 : index
    %169 = vector.load %arg13[%c0_66, %c0_67] : memref<4x1xf32, #tpu.memory_space<vmem>>, vector<4x1xf32>
    %170 = vector.broadcast %5 : vector<1x384xf32> to vector<4x384xf32>
    %171 = arith.mulf %167, %170 : vector<4x384xf32>
    %cst = arith.constant dense<0.000000e+00> : vector<4xf32>
    %172 = vector.multi_reduction <add>, %171, %cst [1] : vector<4x384xf32> to vector<4xf32>
    %173 = vector.shape_cast %172 : vector<4xf32> to vector<4x1xf32>
    %174 = arith.mulf %171, %167 : vector<4x384xf32>
    %cst_68 = arith.constant dense<0.000000e+00> : vector<4xf32>
    %175 = vector.multi_reduction <add>, %174, %cst_68 [1] : vector<4x384xf32> to vector<4xf32>
    %176 = vector.shape_cast %175 : vector<4xf32> to vector<4x1xf32>
    %cst_69 = arith.constant dense<0.000000e+00> : vector<1xf32>
    %177 = vector.multi_reduction <add>, %173, %cst_69 [0] : vector<4x1xf32> to vector<1xf32>
    %178 = vector.shape_cast %177 : vector<1xf32> to vector<1x1xf32>
    %cst_70 = arith.constant 9.765625E-4 : f32
    %179 = vector.broadcast %cst_70 : f32 to vector<1x1xf32>
    %180 = arith.mulf %178, %179 : vector<1x1xf32>
    %cst_71 = arith.constant dense<0.000000e+00> : vector<1xf32>
    %181 = vector.multi_reduction <add>, %176, %cst_71 [0] : vector<4x1xf32> to vector<1xf32>
    %182 = vector.shape_cast %181 : vector<1xf32> to vector<1x1xf32>
    %cst_72 = arith.constant 9.765625E-4 : f32
    %183 = vector.broadcast %cst_72 : f32 to vector<1x1xf32>
    %184 = arith.mulf %182, %183 : vector<1x1xf32>
    %185 = arith.mulf %180, %180 : vector<1x1xf32>
    %186 = arith.subf %184, %185 : vector<1x1xf32>
    %cst_73 = arith.constant 9.99999974E-6 : f32
    %187 = vector.broadcast %cst_73 : f32 to vector<1x1xf32>
    %188 = arith.addf %186, %187 : vector<1x1xf32>
    %189 = math.rsqrt %188 : vector<1x1xf32>
    %190 = vector.broadcast %189 : vector<1x1xf32> to vector<4x1xf32>
    %191 = arith.mulf %168, %190 : vector<4x1xf32>
    %192 = vector.broadcast %180 : vector<1x1xf32> to vector<4x1xf32>
    %193 = arith.mulf %192, %191 : vector<4x1xf32>
    %194 = arith.subf %169, %193 : vector<4x1xf32>
    %195 = vector.broadcast %191 : vector<4x1xf32> to vector<4x384xf32>
    %196 = arith.mulf %167, %195 : vector<4x384xf32>
    %197 = vector.broadcast %194 : vector<4x1xf32> to vector<4x384xf32>
    %198 = arith.addf %196, %197 : vector<4x384xf32>
    %cst_74 = arith.constant 0.000000e+00 : f32
    %199 = vector.broadcast %cst_74 : f32 to vector<4x384xf32>
    %200 = arith.maximumf %198, %199 : vector<4x384xf32>
    %c0_75 = arith.constant 0 : index
    %c0_76 = arith.constant 0 : index
    %201 = vector.load %arg4[%c0_75, %c0_76] : memref<6x4xf32, #tpu.memory_space<vmem>>, vector<6x4xf32>
    %202 = vector.extract_strided_slice %201 {offsets = [0, 0], sizes = [6, 1], strides = [1, 1]} : vector<6x4xf32> to vector<6x1xf32>
    %203 = vector.extract_strided_slice %200 {offsets = [0, 0], sizes = [1, 384], strides = [1, 1]} : vector<4x384xf32> to vector<1x384xf32>
    %204 = vector.broadcast %202 : vector<6x1xf32> to vector<6x384xf32>
    %205 = vector.broadcast %203 : vector<1x384xf32> to vector<6x384xf32>
    %206 = arith.mulf %204, %205 : vector<6x384xf32>
    %207 = vector.extract_strided_slice %201 {offsets = [0, 1], sizes = [6, 1], strides = [1, 1]} : vector<6x4xf32> to vector<6x1xf32>
    %208 = vector.extract_strided_slice %200 {offsets = [1, 0], sizes = [1, 384], strides = [1, 1]} : vector<4x384xf32> to vector<1x384xf32>
    %209 = vector.broadcast %207 : vector<6x1xf32> to vector<6x384xf32>
    %210 = vector.broadcast %208 : vector<1x384xf32> to vector<6x384xf32>
    %211 = arith.mulf %209, %210 : vector<6x384xf32>
    %212 = arith.addf %206, %211 : vector<6x384xf32>
    %213 = vector.extract_strided_slice %201 {offsets = [0, 2], sizes = [6, 1], strides = [1, 1]} : vector<6x4xf32> to vector<6x1xf32>
    %214 = vector.extract_strided_slice %200 {offsets = [2, 0], sizes = [1, 384], strides = [1, 1]} : vector<4x384xf32> to vector<1x384xf32>
    %215 = vector.broadcast %213 : vector<6x1xf32> to vector<6x384xf32>
    %216 = vector.broadcast %214 : vector<1x384xf32> to vector<6x384xf32>
    %217 = arith.mulf %215, %216 : vector<6x384xf32>
    %218 = arith.addf %212, %217 : vector<6x384xf32>
    %219 = vector.extract_strided_slice %201 {offsets = [0, 3], sizes = [6, 1], strides = [1, 1]} : vector<6x4xf32> to vector<6x1xf32>
    %220 = vector.extract_strided_slice %200 {offsets = [3, 0], sizes = [1, 384], strides = [1, 1]} : vector<4x384xf32> to vector<1x384xf32>
    %221 = vector.broadcast %219 : vector<6x1xf32> to vector<6x384xf32>
    %222 = vector.broadcast %220 : vector<1x384xf32> to vector<6x384xf32>
    %223 = arith.mulf %221, %222 : vector<6x384xf32>
    %224 = arith.addf %218, %223 : vector<6x384xf32>
    %c0_77 = arith.constant 0 : index
    %c0_78 = arith.constant 0 : index
    %225 = vector.load %arg5[%c0_77, %c0_78] : memref<6x1xf32, #tpu.memory_space<vmem>>, vector<6x1xf32>
    %226 = vector.broadcast %225 : vector<6x1xf32> to vector<6x384xf32>
    %227 = arith.addf %224, %226 : vector<6x384xf32>
    %c0_79 = arith.constant 0 : index
    %c0_80 = arith.constant 0 : index
    %228 = vector.load %arg6[%c0_79, %c0_80] : memref<4x6xf32, #tpu.memory_space<vmem>>, vector<4x6xf32>
    %229 = vector.extract_strided_slice %228 {offsets = [0, 0], sizes = [4, 1], strides = [1, 1]} : vector<4x6xf32> to vector<4x1xf32>
    %230 = vector.extract_strided_slice %227 {offsets = [0, 0], sizes = [1, 384], strides = [1, 1]} : vector<6x384xf32> to vector<1x384xf32>
    %231 = vector.broadcast %229 : vector<4x1xf32> to vector<4x384xf32>
    %232 = vector.broadcast %230 : vector<1x384xf32> to vector<4x384xf32>
    %233 = arith.mulf %231, %232 : vector<4x384xf32>
    %234 = vector.extract_strided_slice %228 {offsets = [0, 1], sizes = [4, 1], strides = [1, 1]} : vector<4x6xf32> to vector<4x1xf32>
    %235 = vector.extract_strided_slice %227 {offsets = [1, 0], sizes = [1, 384], strides = [1, 1]} : vector<6x384xf32> to vector<1x384xf32>
    %236 = vector.broadcast %234 : vector<4x1xf32> to vector<4x384xf32>
    %237 = vector.broadcast %235 : vector<1x384xf32> to vector<4x384xf32>
    %238 = arith.mulf %236, %237 : vector<4x384xf32>
    %239 = arith.addf %233, %238 : vector<4x384xf32>
    %240 = vector.extract_strided_slice %228 {offsets = [0, 2], sizes = [4, 1], strides = [1, 1]} : vector<4x6xf32> to vector<4x1xf32>
    %241 = vector.extract_strided_slice %227 {offsets = [2, 0], sizes = [1, 384], strides = [1, 1]} : vector<6x384xf32> to vector<1x384xf32>
    %242 = vector.broadcast %240 : vector<4x1xf32> to vector<4x384xf32>
    %243 = vector.broadcast %241 : vector<1x384xf32> to vector<4x384xf32>
    %244 = arith.mulf %242, %243 : vector<4x384xf32>
    %245 = arith.addf %239, %244 : vector<4x384xf32>
    %246 = vector.extract_strided_slice %228 {offsets = [0, 3], sizes = [4, 1], strides = [1, 1]} : vector<4x6xf32> to vector<4x1xf32>
    %247 = vector.extract_strided_slice %227 {offsets = [3, 0], sizes = [1, 384], strides = [1, 1]} : vector<6x384xf32> to vector<1x384xf32>
    %248 = vector.broadcast %246 : vector<4x1xf32> to vector<4x384xf32>
    %249 = vector.broadcast %247 : vector<1x384xf32> to vector<4x384xf32>
    %250 = arith.mulf %248, %249 : vector<4x384xf32>
    %251 = arith.addf %245, %250 : vector<4x384xf32>
    %252 = vector.extract_strided_slice %228 {offsets = [0, 4], sizes = [4, 1], strides = [1, 1]} : vector<4x6xf32> to vector<4x1xf32>
    %253 = vector.extract_strided_slice %227 {offsets = [4, 0], sizes = [1, 384], strides = [1, 1]} : vector<6x384xf32> to vector<1x384xf32>
    %254 = vector.broadcast %252 : vector<4x1xf32> to vector<4x384xf32>
    %255 = vector.broadcast %253 : vector<1x384xf32> to vector<4x384xf32>
    %256 = arith.mulf %254, %255 : vector<4x384xf32>
    %257 = arith.addf %251, %256 : vector<4x384xf32>
    %258 = vector.extract_strided_slice %228 {offsets = [0, 5], sizes = [4, 1], strides = [1, 1]} : vector<4x6xf32> to vector<4x1xf32>
    %259 = vector.extract_strided_slice %227 {offsets = [5, 0], sizes = [1, 384], strides = [1, 1]} : vector<6x384xf32> to vector<1x384xf32>
    %260 = vector.broadcast %258 : vector<4x1xf32> to vector<4x384xf32>
    %261 = vector.broadcast %259 : vector<1x384xf32> to vector<4x384xf32>
    %262 = arith.mulf %260, %261 : vector<4x384xf32>
    %263 = arith.addf %257, %262 : vector<4x384xf32>
    %c0_81 = arith.constant 0 : index
    %c0_82 = arith.constant 0 : index
    %264 = vector.load %arg7[%c0_81, %c0_82] : memref<4x1xf32, #tpu.memory_space<vmem>>, vector<4x1xf32>
    %265 = vector.broadcast %264 : vector<4x1xf32> to vector<4x384xf32>
    %266 = arith.addf %263, %265 : vector<4x384xf32>
    %267 = arith.addf %200, %266 : vector<4x384xf32>
    %c0_83 = arith.constant 0 : index
    %c0_84 = arith.constant 0 : index
    %268 = vector.load %arg14[%c0_83, %c0_84] : memref<4x1xf32, #tpu.memory_space<vmem>>, vector<4x1xf32>
    %c0_85 = arith.constant 0 : index
    %c0_86 = arith.constant 0 : index
    %269 = vector.load %arg15[%c0_85, %c0_86] : memref<4x1xf32, #tpu.memory_space<vmem>>, vector<4x1xf32>
    %270 = vector.broadcast %5 : vector<1x384xf32> to vector<4x384xf32>
    %271 = arith.mulf %267, %270 : vector<4x384xf32>
    %cst_87 = arith.constant dense<0.000000e+00> : vector<4xf32>
    %272 = vector.multi_reduction <add>, %271, %cst_87 [1] : vector<4x384xf32> to vector<4xf32>
    %273 = vector.shape_cast %272 : vector<4xf32> to vector<4x1xf32>
    %274 = arith.mulf %271, %267 : vector<4x384xf32>
    %cst_88 = arith.constant dense<0.000000e+00> : vector<4xf32>
    %275 = vector.multi_reduction <add>, %274, %cst_88 [1] : vector<4x384xf32> to vector<4xf32>
    %276 = vector.shape_cast %275 : vector<4xf32> to vector<4x1xf32>
    %cst_89 = arith.constant dense<0.000000e+00> : vector<1xf32>
    %277 = vector.multi_reduction <add>, %273, %cst_89 [0] : vector<4x1xf32> to vector<1xf32>
    %278 = vector.shape_cast %277 : vector<1xf32> to vector<1x1xf32>
    %cst_90 = arith.constant 9.765625E-4 : f32
    %279 = vector.broadcast %cst_90 : f32 to vector<1x1xf32>
    %280 = arith.mulf %278, %279 : vector<1x1xf32>
    %cst_91 = arith.constant dense<0.000000e+00> : vector<1xf32>
    %281 = vector.multi_reduction <add>, %276, %cst_91 [0] : vector<4x1xf32> to vector<1xf32>
    %282 = vector.shape_cast %281 : vector<1xf32> to vector<1x1xf32>
    %cst_92 = arith.constant 9.765625E-4 : f32
    %283 = vector.broadcast %cst_92 : f32 to vector<1x1xf32>
    %284 = arith.mulf %282, %283 : vector<1x1xf32>
    %285 = arith.mulf %280, %280 : vector<1x1xf32>
    %286 = arith.subf %284, %285 : vector<1x1xf32>
    %cst_93 = arith.constant 9.99999974E-6 : f32
    %287 = vector.broadcast %cst_93 : f32 to vector<1x1xf32>
    %288 = arith.addf %286, %287 : vector<1x1xf32>
    %289 = math.rsqrt %288 : vector<1x1xf32>
    %290 = vector.broadcast %289 : vector<1x1xf32> to vector<4x1xf32>
    %291 = arith.mulf %268, %290 : vector<4x1xf32>
    %292 = vector.broadcast %280 : vector<1x1xf32> to vector<4x1xf32>
    %293 = arith.mulf %292, %291 : vector<4x1xf32>
    %294 = arith.subf %269, %293 : vector<4x1xf32>
    %295 = vector.broadcast %291 : vector<4x1xf32> to vector<4x384xf32>
    %296 = arith.mulf %267, %295 : vector<4x384xf32>
    %297 = vector.broadcast %294 : vector<4x1xf32> to vector<4x384xf32>
    %298 = arith.addf %296, %297 : vector<4x384xf32>
    %cst_94 = arith.constant 0.000000e+00 : f32
    %299 = vector.broadcast %cst_94 : f32 to vector<4x384xf32>
    %300 = arith.maximumf %298, %299 : vector<4x384xf32>
    %c0_95 = arith.constant 0 : index
    %c0_96 = arith.constant 0 : index
    %301 = vector.load %arg8[%c0_95, %c0_96] : memref<6x4xf32, #tpu.memory_space<vmem>>, vector<6x4xf32>
    %302 = vector.extract_strided_slice %301 {offsets = [0, 0], sizes = [6, 1], strides = [1, 1]} : vector<6x4xf32> to vector<6x1xf32>
    %303 = vector.extract_strided_slice %300 {offsets = [0, 0], sizes = [1, 384], strides = [1, 1]} : vector<4x384xf32> to vector<1x384xf32>
    %304 = vector.broadcast %302 : vector<6x1xf32> to vector<6x384xf32>
    %305 = vector.broadcast %303 : vector<1x384xf32> to vector<6x384xf32>
    %306 = arith.mulf %304, %305 : vector<6x384xf32>
    %307 = vector.extract_strided_slice %301 {offsets = [0, 1], sizes = [6, 1], strides = [1, 1]} : vector<6x4xf32> to vector<6x1xf32>
    %308 = vector.extract_strided_slice %300 {offsets = [1, 0], sizes = [1, 384], strides = [1, 1]} : vector<4x384xf32> to vector<1x384xf32>
    %309 = vector.broadcast %307 : vector<6x1xf32> to vector<6x384xf32>
    %310 = vector.broadcast %308 : vector<1x384xf32> to vector<6x384xf32>
    %311 = arith.mulf %309, %310 : vector<6x384xf32>
    %312 = arith.addf %306, %311 : vector<6x384xf32>
    %313 = vector.extract_strided_slice %301 {offsets = [0, 2], sizes = [6, 1], strides = [1, 1]} : vector<6x4xf32> to vector<6x1xf32>
    %314 = vector.extract_strided_slice %300 {offsets = [2, 0], sizes = [1, 384], strides = [1, 1]} : vector<4x384xf32> to vector<1x384xf32>
    %315 = vector.broadcast %313 : vector<6x1xf32> to vector<6x384xf32>
    %316 = vector.broadcast %314 : vector<1x384xf32> to vector<6x384xf32>
    %317 = arith.mulf %315, %316 : vector<6x384xf32>
    %318 = arith.addf %312, %317 : vector<6x384xf32>
    %319 = vector.extract_strided_slice %301 {offsets = [0, 3], sizes = [6, 1], strides = [1, 1]} : vector<6x4xf32> to vector<6x1xf32>
    %320 = vector.extract_strided_slice %300 {offsets = [3, 0], sizes = [1, 384], strides = [1, 1]} : vector<4x384xf32> to vector<1x384xf32>
    %321 = vector.broadcast %319 : vector<6x1xf32> to vector<6x384xf32>
    %322 = vector.broadcast %320 : vector<1x384xf32> to vector<6x384xf32>
    %323 = arith.mulf %321, %322 : vector<6x384xf32>
    %324 = arith.addf %318, %323 : vector<6x384xf32>
    %c0_97 = arith.constant 0 : index
    %c0_98 = arith.constant 0 : index
    %325 = vector.load %arg9[%c0_97, %c0_98] : memref<6x1xf32, #tpu.memory_space<vmem>>, vector<6x1xf32>
    %326 = vector.broadcast %325 : vector<6x1xf32> to vector<6x384xf32>
    %327 = arith.addf %324, %326 : vector<6x384xf32>
    %c0_99 = arith.constant 0 : index
    %c0_100 = arith.constant 0 : index
    %328 = vector.load %arg10[%c0_99, %c0_100] : memref<8x6xf32, #tpu.memory_space<vmem>>, vector<8x6xf32>
    %329 = vector.extract_strided_slice %328 {offsets = [0, 0], sizes = [8, 1], strides = [1, 1]} : vector<8x6xf32> to vector<8x1xf32>
    %330 = vector.extract_strided_slice %327 {offsets = [0, 0], sizes = [1, 384], strides = [1, 1]} : vector<6x384xf32> to vector<1x384xf32>
    %331 = vector.broadcast %329 : vector<8x1xf32> to vector<8x384xf32>
    %332 = vector.broadcast %330 : vector<1x384xf32> to vector<8x384xf32>
    %333 = arith.mulf %331, %332 : vector<8x384xf32>
    %334 = vector.extract_strided_slice %328 {offsets = [0, 1], sizes = [8, 1], strides = [1, 1]} : vector<8x6xf32> to vector<8x1xf32>
    %335 = vector.extract_strided_slice %327 {offsets = [1, 0], sizes = [1, 384], strides = [1, 1]} : vector<6x384xf32> to vector<1x384xf32>
    %336 = vector.broadcast %334 : vector<8x1xf32> to vector<8x384xf32>
    %337 = vector.broadcast %335 : vector<1x384xf32> to vector<8x384xf32>
    %338 = arith.mulf %336, %337 : vector<8x384xf32>
    %339 = arith.addf %333, %338 : vector<8x384xf32>
    %340 = vector.extract_strided_slice %328 {offsets = [0, 2], sizes = [8, 1], strides = [1, 1]} : vector<8x6xf32> to vector<8x1xf32>
    %341 = vector.extract_strided_slice %327 {offsets = [2, 0], sizes = [1, 384], strides = [1, 1]} : vector<6x384xf32> to vector<1x384xf32>
    %342 = vector.broadcast %340 : vector<8x1xf32> to vector<8x384xf32>
    %343 = vector.broadcast %341 : vector<1x384xf32> to vector<8x384xf32>
    %344 = arith.mulf %342, %343 : vector<8x384xf32>
    %345 = arith.addf %339, %344 : vector<8x384xf32>
    %346 = vector.extract_strided_slice %328 {offsets = [0, 3], sizes = [8, 1], strides = [1, 1]} : vector<8x6xf32> to vector<8x1xf32>
    %347 = vector.extract_strided_slice %327 {offsets = [3, 0], sizes = [1, 384], strides = [1, 1]} : vector<6x384xf32> to vector<1x384xf32>
    %348 = vector.broadcast %346 : vector<8x1xf32> to vector<8x384xf32>
    %349 = vector.broadcast %347 : vector<1x384xf32> to vector<8x384xf32>
    %350 = arith.mulf %348, %349 : vector<8x384xf32>
    %351 = arith.addf %345, %350 : vector<8x384xf32>
    %352 = vector.extract_strided_slice %328 {offsets = [0, 4], sizes = [8, 1], strides = [1, 1]} : vector<8x6xf32> to vector<8x1xf32>
    %353 = vector.extract_strided_slice %327 {offsets = [4, 0], sizes = [1, 384], strides = [1, 1]} : vector<6x384xf32> to vector<1x384xf32>
    %354 = vector.broadcast %352 : vector<8x1xf32> to vector<8x384xf32>
    %355 = vector.broadcast %353 : vector<1x384xf32> to vector<8x384xf32>
    %356 = arith.mulf %354, %355 : vector<8x384xf32>
    %357 = arith.addf %351, %356 : vector<8x384xf32>
    %358 = vector.extract_strided_slice %328 {offsets = [0, 5], sizes = [8, 1], strides = [1, 1]} : vector<8x6xf32> to vector<8x1xf32>
    %359 = vector.extract_strided_slice %327 {offsets = [5, 0], sizes = [1, 384], strides = [1, 1]} : vector<6x384xf32> to vector<1x384xf32>
    %360 = vector.broadcast %358 : vector<8x1xf32> to vector<8x384xf32>
    %361 = vector.broadcast %359 : vector<1x384xf32> to vector<8x384xf32>
    %362 = arith.mulf %360, %361 : vector<8x384xf32>
    %363 = arith.addf %357, %362 : vector<8x384xf32>
    %c0_101 = arith.constant 0 : index
    %c0_102 = arith.constant 0 : index
    %364 = vector.load %arg11[%c0_101, %c0_102] : memref<8x1xf32, #tpu.memory_space<vmem>>, vector<8x1xf32>
    %365 = vector.broadcast %364 : vector<8x1xf32> to vector<8x384xf32>
    %366 = arith.addf %363, %365 : vector<8x384xf32>
    %c0_103 = arith.constant 0 : index
    %c0_104 = arith.constant 0 : index
    %367 = vector.load %arg16[%c0_103, %c0_104] : memref<8x1xf32, #tpu.memory_space<vmem>>, vector<8x1xf32>
    %c0_105 = arith.constant 0 : index
    %c0_106 = arith.constant 0 : index
    %368 = vector.load %arg17[%c0_105, %c0_106] : memref<8x1xf32, #tpu.memory_space<vmem>>, vector<8x1xf32>
    %369 = vector.broadcast %5 : vector<1x384xf32> to vector<8x384xf32>
    %370 = arith.mulf %366, %369 : vector<8x384xf32>
    %cst_107 = arith.constant dense<0.000000e+00> : vector<8xf32>
    %371 = vector.multi_reduction <add>, %370, %cst_107 [1] : vector<8x384xf32> to vector<8xf32>
    %372 = vector.shape_cast %371 : vector<8xf32> to vector<8x1xf32>
    %373 = arith.mulf %370, %366 : vector<8x384xf32>
    %cst_108 = arith.constant dense<0.000000e+00> : vector<8xf32>
    %374 = vector.multi_reduction <add>, %373, %cst_108 [1] : vector<8x384xf32> to vector<8xf32>
    %375 = vector.shape_cast %374 : vector<8xf32> to vector<8x1xf32>
    %376 = vector.extract_strided_slice %372 {offsets = [0, 0], sizes = [4, 1], strides = [1, 1]} : vector<8x1xf32> to vector<4x1xf32>
    %cst_109 = arith.constant dense<0.000000e+00> : vector<1xf32>
    %377 = vector.multi_reduction <add>, %376, %cst_109 [0] : vector<4x1xf32> to vector<1xf32>
    %378 = vector.shape_cast %377 : vector<1xf32> to vector<1x1xf32>
    %cst_110 = arith.constant 9.765625E-4 : f32
    %379 = vector.broadcast %cst_110 : f32 to vector<1x1xf32>
    %380 = arith.mulf %378, %379 : vector<1x1xf32>
    %381 = vector.extract_strided_slice %375 {offsets = [0, 0], sizes = [4, 1], strides = [1, 1]} : vector<8x1xf32> to vector<4x1xf32>
    %cst_111 = arith.constant dense<0.000000e+00> : vector<1xf32>
    %382 = vector.multi_reduction <add>, %381, %cst_111 [0] : vector<4x1xf32> to vector<1xf32>
    %383 = vector.shape_cast %382 : vector<1xf32> to vector<1x1xf32>
    %cst_112 = arith.constant 9.765625E-4 : f32
    %384 = vector.broadcast %cst_112 : f32 to vector<1x1xf32>
    %385 = arith.mulf %383, %384 : vector<1x1xf32>
    %386 = arith.mulf %380, %380 : vector<1x1xf32>
    %387 = arith.subf %385, %386 : vector<1x1xf32>
    %cst_113 = arith.constant 9.99999974E-6 : f32
    %388 = vector.broadcast %cst_113 : f32 to vector<1x1xf32>
    %389 = arith.addf %387, %388 : vector<1x1xf32>
    %390 = math.rsqrt %389 : vector<1x1xf32>
    %391 = vector.extract_strided_slice %367 {offsets = [0, 0], sizes = [4, 1], strides = [1, 1]} : vector<8x1xf32> to vector<4x1xf32>
    %392 = vector.broadcast %390 : vector<1x1xf32> to vector<4x1xf32>
    %393 = arith.mulf %391, %392 : vector<4x1xf32>
    %394 = vector.extract_strided_slice %368 {offsets = [0, 0], sizes = [4, 1], strides = [1, 1]} : vector<8x1xf32> to vector<4x1xf32>
    %395 = vector.broadcast %380 : vector<1x1xf32> to vector<4x1xf32>
    %396 = arith.mulf %395, %393 : vector<4x1xf32>
    %397 = arith.subf %394, %396 : vector<4x1xf32>
    %398 = vector.extract_strided_slice %372 {offsets = [4, 0], sizes = [4, 1], strides = [1, 1]} : vector<8x1xf32> to vector<4x1xf32>
    %cst_114 = arith.constant dense<0.000000e+00> : vector<1xf32>
    %399 = vector.multi_reduction <add>, %398, %cst_114 [0] : vector<4x1xf32> to vector<1xf32>
    %400 = vector.shape_cast %399 : vector<1xf32> to vector<1x1xf32>
    %cst_115 = arith.constant 9.765625E-4 : f32
    %401 = vector.broadcast %cst_115 : f32 to vector<1x1xf32>
    %402 = arith.mulf %400, %401 : vector<1x1xf32>
    %403 = vector.extract_strided_slice %375 {offsets = [4, 0], sizes = [4, 1], strides = [1, 1]} : vector<8x1xf32> to vector<4x1xf32>
    %cst_116 = arith.constant dense<0.000000e+00> : vector<1xf32>
    %404 = vector.multi_reduction <add>, %403, %cst_116 [0] : vector<4x1xf32> to vector<1xf32>
    %405 = vector.shape_cast %404 : vector<1xf32> to vector<1x1xf32>
    %cst_117 = arith.constant 9.765625E-4 : f32
    %406 = vector.broadcast %cst_117 : f32 to vector<1x1xf32>
    %407 = arith.mulf %405, %406 : vector<1x1xf32>
    %408 = arith.mulf %402, %402 : vector<1x1xf32>
    %409 = arith.subf %407, %408 : vector<1x1xf32>
    %cst_118 = arith.constant 9.99999974E-6 : f32
    %410 = vector.broadcast %cst_118 : f32 to vector<1x1xf32>
    %411 = arith.addf %409, %410 : vector<1x1xf32>
    %412 = math.rsqrt %411 : vector<1x1xf32>
    %413 = vector.extract_strided_slice %367 {offsets = [4, 0], sizes = [4, 1], strides = [1, 1]} : vector<8x1xf32> to vector<4x1xf32>
    %414 = vector.broadcast %412 : vector<1x1xf32> to vector<4x1xf32>
    %415 = arith.mulf %413, %414 : vector<4x1xf32>
    %416 = vector.extract_strided_slice %368 {offsets = [4, 0], sizes = [4, 1], strides = [1, 1]} : vector<8x1xf32> to vector<4x1xf32>
    %417 = vector.broadcast %402 : vector<1x1xf32> to vector<4x1xf32>
    %418 = arith.mulf %417, %415 : vector<4x1xf32>
    %419 = arith.subf %416, %418 : vector<4x1xf32>
    %420 = tpu.concatenate %393, %415 in 0 : vector<4x1xf32>, vector<4x1xf32> -> vector<8x1xf32>
    %421 = tpu.concatenate %397, %419 in 0 : vector<4x1xf32>, vector<4x1xf32> -> vector<8x1xf32>
    %422 = vector.broadcast %420 : vector<8x1xf32> to vector<8x384xf32>
    %423 = arith.mulf %366, %422 : vector<8x384xf32>
    %424 = vector.broadcast %421 : vector<8x1xf32> to vector<8x384xf32>
    %425 = arith.addf %423, %424 : vector<8x384xf32>
    %c0_119 = arith.constant 0 : index
    %c0_120 = arith.constant 0 : index
    %c0_121 = arith.constant 0 : index
    %426 = vector.load %arg18[%c0_119, %c0_120, %c0_121] : memref<1x8x384xf32, #tpu.memory_space<vmem>>, vector<1x8x384xf32>
    %427 = vector.shape_cast %426 : vector<1x8x384xf32> to vector<8x384xf32>
    %428 = vector.shape_cast %425 : vector<8x384xf32> to vector<1x8x384xf32>
    tpu.vector_store %arg18[%c0_119, %c0_120, %c0_121], %428 {strides = array<i32>} : memref<1x8x384xf32, #tpu.memory_space<vmem>>, vector<1x8x384xf32>,
    return
  }
  func.func @transform_0(%arg0: i32) -> (i32, i32, i32) {
    %c0_i32 = arith.constant 0 : i32
    %c0_i32_0 = arith.constant 0 : i32
    %c0_i32_1 = arith.constant 0 : i32
    return %arg0, %c0_i32, %c0_i32_0 : i32, i32, i32
  }
  func.func @transform_1(%arg0: i32) -> (i32, i32, i32) {
    %c0_i32 = arith.constant 0 : i32
    %c0_i32_0 = arith.constant 0 : i32
    %c0_i32_1 = arith.constant 0 : i32
    %c0_i32_2 = arith.constant 0 : i32
    return %c0_i32, %c0_i32_0, %c0_i32_1 : i32, i32, i32
  }
  func.func @transform_2(%arg0: i32) -> (i32, i32) {
    %c0_i32 = arith.constant 0 : i32
    %c0_i32_0 = arith.constant 0 : i32
    %c0_i32_1 = arith.constant 0 : i32
    return %c0_i32, %c0_i32_0 : i32, i32
  }
  func.func @transform_3(%arg0: i32) -> (i32, i32) {
    %c0_i32 = arith.constant 0 : i32
    %c0_i32_0 = arith.constant 0 : i32
    %c0_i32_1 = arith.constant 0 : i32
    return %c0_i32, %c0_i32_0 : i32, i32
  }
  func.func @transform_4(%arg0: i32) -> (i32, i32) {
    %c0_i32 = arith.constant 0 : i32
    %c0_i32_0 = arith.constant 0 : i32
    %c0_i32_1 = arith.constant 0 : i32
    return %c0_i32, %c0_i32_0 : i32, i32
  }
  func.func @transform_5(%arg0: i32) -> (i32, i32) {
    %c0_i32 = arith.constant 0 : i32
    %c0_i32_0 = arith.constant 0 : i32
    %c0_i32_1 = arith.constant 0 : i32
    return %c0_i32, %c0_i32_0 : i32, i32
  }
  func.func @transform_6(%arg0: i32) -> (i32, i32) {
    %c0_i32 = arith.constant 0 : i32
    %c0_i32_0 = arith.constant 0 : i32
    %c0_i32_1 = arith.constant 0 : i32
    return %c0_i32, %c0_i32_0 : i32, i32
  }
  func.func @transform_7(%arg0: i32) -> (i32, i32) {
    %c0_i32 = arith.constant 0 : i32
    %c0_i32_0 = arith.constant 0 : i32
    %c0_i32_1 = arith.constant 0 : i32
    return %c0_i32, %c0_i32_0 : i32, i32
  }
  func.func @transform_8(%arg0: i32) -> (i32, i32) {
    %c0_i32 = arith.constant 0 : i32
    %c0_i32_0 = arith.constant 0 : i32
    %c0_i32_1 = arith.constant 0 : i32
    return %c0_i32, %c0_i32_0 : i32, i32
  }
  func.func @transform_9(%arg0: i32) -> (i32, i32) {
    %c0_i32 = arith.constant 0 : i32
    %c0_i32_0 = arith.constant 0 : i32
    %c0_i32_1 = arith.constant 0 : i32
    return %c0_i32, %c0_i32_0 : i32, i32
  }
  func.func @transform_10(%arg0: i32) -> (i32, i32) {
    %c0_i32 = arith.constant 0 : i32
    %c0_i32_0 = arith.constant 0 : i32
    %c0_i32_1 = arith.constant 0 : i32
    return %c0_i32, %c0_i32_0 : i32, i32
  }
  func.func @transform_11(%arg0: i32) -> (i32, i32) {
    %c0_i32 = arith.constant 0 : i32
    %c0_i32_0 = arith.constant 0 : i32
    %c0_i32_1 = arith.constant 0 : i32
    return %c0_i32, %c0_i32_0 : i32, i32
  }
  func.func @transform_12(%arg0: i32) -> (i32, i32) {
    %c0_i32 = arith.constant 0 : i32
    %c0_i32_0 = arith.constant 0 : i32
    %c0_i32_1 = arith.constant 0 : i32
    return %c0_i32, %c0_i32_0 : i32, i32
  }
  func.func @transform_13(%arg0: i32) -> (i32, i32) {
    %c0_i32 = arith.constant 0 : i32
    %c0_i32_0 = arith.constant 0 : i32
    %c0_i32_1 = arith.constant 0 : i32
    return %c0_i32, %c0_i32_0 : i32, i32
  }
  func.func @transform_14(%arg0: i32) -> (i32, i32) {
    %c0_i32 = arith.constant 0 : i32
    %c0_i32_0 = arith.constant 0 : i32
    %c0_i32_1 = arith.constant 0 : i32
    return %c0_i32, %c0_i32_0 : i32, i32
  }
  func.func @transform_15(%arg0: i32) -> (i32, i32) {
    %c0_i32 = arith.constant 0 : i32
    %c0_i32_0 = arith.constant 0 : i32
    %c0_i32_1 = arith.constant 0 : i32
    return %c0_i32, %c0_i32_0 : i32, i32
  }
  func.func @transform_16(%arg0: i32) -> (i32, i32) {
    %c0_i32 = arith.constant 0 : i32
    %c0_i32_0 = arith.constant 0 : i32
    %c0_i32_1 = arith.constant 0 : i32
    return %c0_i32, %c0_i32_0 : i32, i32
  }
  func.func @transform_17(%arg0: i32) -> (i32, i32, i32) {
    %c0_i32 = arith.constant 0 : i32
    %c0_i32_0 = arith.constant 0 : i32
    %c0_i32_1 = arith.constant 0 : i32
    return %arg0, %c0_i32, %c0_i32_0 : i32, i32, i32
  }
}

</mosaic_0001>

<llo_original>
// kernel: _lambda_.1
$region0: #{_lambda_.1}
  #allocation0 [shape = 'u32[]', space=smem, size = 0x4, offset = 0x4, fixed_abs, tag = 'smem constant byte address 0x4 - core index']
  #allocation1 [shape = 'u32[144,128]{1,0:T(1,128)}', space=vmem, size = 0x12000, scoped, tag = 'internal scratch']
  %s0 = inlined_call_operand.vmem [shape: f32[2,4,504], index: 0, kind: input, shape index: {}]
  %s1 = inlined_call_operand.vmem [shape: f32[25,4,1], index: 1, kind: input, shape index: {}]
  %s2 = inlined_call_operand.vmem [shape: f32[4,1], index: 2, kind: input, shape index: {}]
  %s3 = inlined_call_operand.vmem [shape: f32[6,4], index: 3, kind: input, shape index: {}]
  %s4 = inlined_call_operand.vmem [shape: f32[6,1], index: 4, kind: input, shape index: {}]
  %s5 = inlined_call_operand.vmem [shape: f32[4,6], index: 5, kind: input, shape index: {}]
  %s6 = inlined_call_operand.vmem [shape: f32[4,1], index: 6, kind: input, shape index: {}]
  %s7 = inlined_call_operand.vmem [shape: f32[6,4], index: 7, kind: input, shape index: {}]
  %s8 = inlined_call_operand.vmem [shape: f32[6,1], index: 8, kind: input, shape index: {}]
  %s9 = inlined_call_operand.vmem [shape: f32[8,6], index: 9, kind: input, shape index: {}]
  %s10 = inlined_call_operand.vmem [shape: f32[8,1], index: 10, kind: input, shape index: {}]
  %s11 = inlined_call_operand.vmem [shape: f32[4,1], index: 11, kind: input, shape index: {}, may-alias: {11,13}]
  %s12 = inlined_call_operand.vmem [shape: f32[4,1], index: 12, kind: input, shape index: {}, may-alias: {12,14}]
  %s13 = inlined_call_operand.vmem [shape: f32[4,1], index: 13, kind: input, shape index: {}, may-alias: {11,13}]
  %s14 = inlined_call_operand.vmem [shape: f32[4,1], index: 14, kind: input, shape index: {}, may-alias: {12,14}]
  %s15 = inlined_call_operand.vmem [shape: f32[8,1], index: 15, kind: input, shape index: {}]
  %s16 = inlined_call_operand.vmem [shape: f32[8,1], index: 16, kind: input, shape index: {}]
  %s17 = inlined_call_operand.vmem [shape: f32[2,8,384], index: 17, kind: output, shape index: {}]
  %s18 = sld [smem:[#allocation0]]
  $region101: #{_lambda_.1} parent=0
    _
  %s20 = ssub.s32 1, %s18
  %s21 = scalar_select 0, %s20, %s18
  loop: start=0, step=1, limit=4
  $region2: #{_lambda_.1} parent=0 // loop_pre_header
    _
  $region3: #{_lambda_.1} parent=0 // loop_header
    %s23 = sphi 0, %s27
    %p24 = scmp.ge.s32.totalorder %s23, 4
    %s33 = sphi 0, %s35
    %s36 = sphi 0, %s33
    %s37 = sphi 0, %s36
    %s53 = sphi 0, %s37
    %s57 = sphi 0, %s57
    %s59 = sphi 0, %s57
    %s60 = sphi 0, %s59
    %s74 = sphi 0, %s60
    %s78 = sphi 0, %s78
    %s80 = sphi 0, %s78
    %s81 = sphi 0, %s80
    %s95 = sphi 0, %s81
    %s99 = sphi 0, %s99
    %s101 = sphi 0, %s99
    %s102 = sphi 0, %s101
    %s116 = sphi 0, %s102
    %s120 = sphi 0, %s120
    %s122 = sphi 0, %s120
    %s123 = sphi 0, %s122
    %s137 = sphi 0, %s123
    %s141 = sphi 0, %s141
    %s143 = sphi 0, %s141
    %s144 = sphi 0, %s143
    %s158 = sphi 0, %s144
    %s162 = sphi 0, %s162
    %s164 = sphi 0, %s162
    %s165 = sphi 0, %s164
    %s179 = sphi 0, %s165
    %s183 = sphi 0, %s183
    %s185 = sphi 0, %s183
    %s186 = sphi 0, %s185
    %s200 = sphi 0, %s186
    %s204 = sphi 0, %s204
    %s206 = sphi 0, %s204
    %s207 = sphi 0, %s206
    %s221 = sphi 0, %s207
    %s225 = sphi 0, %s225
    %s227 = sphi 0, %s225
    %s228 = sphi 0, %s227
    %s242 = sphi 0, %s228
    %s246 = sphi 0, %s246
    %s248 = sphi 0, %s246
    %s249 = sphi 0, %s248
    %s263 = sphi 0, %s249
    %s267 = sphi 0, %s267
    %s269 = sphi 0, %s267
    %s270 = sphi 0, %s269
    %s284 = sphi 0, %s270
    %s288 = sphi 0, %s288
    %s290 = sphi 0, %s288
    %s291 = sphi 0, %s290
    %s305 = sphi 0, %s291
    %s309 = sphi 0, %s309
    %s311 = sphi 0, %s309
    %s312 = sphi 0, %s311
    %s326 = sphi 0, %s312
    %s330 = sphi 0, %s330
    %s332 = sphi 0, %s330
    %s333 = sphi 0, %s332
    %s347 = sphi 0, %s333
    %s351 = sphi 0, %s351
    %s353 = sphi 0, %s351
    %s354 = sphi 0, %s353
    %s368 = sphi 0, %s354
    %s372 = sphi 0, %s372
    %s374 = sphi 0, %s372
    %s375 = sphi 0, %s374
    %s389 = sphi 0, %s375
    %s395 = sphi 0, %s397
    %s398 = sphi 0, %s395
    %s399 = sphi 0, %s398
    %s415 = sphi 0, %s399
  $region4: #{_lambda_.1} parent=0 // loop_header_branch
    %26 = sbr.rel (%p24) target = $region8
  $region5: #{_lambda_.1} parent=0 // loop_body
    %s28 = ssub.s32 %s23, 1
    %s29 = ssub.s32 %s23, 2
    %s30 = sadd.s32 %s23, 1
    %s31 = ssub.s32 %s23, %s30
    %p32 = scmp.eq.s32.totalorder %s31, 0
    %s34 = sadd.s32 %s33, 1
    %s35 = scalar_select %p32, %s33, %s34
    %p38 = pneg %p32
    %p39 = scmp.eq.s32.totalorder %s23, 1
    %p40 = por %p38, %p39
    %p41 = scmp.ne.s32.totalorder %s33, %s36
    %p42 = scmp.eq.s32.totalorder %s23, 0
    %p43 = por %p41, %p42
    %p44 = scmp.ne.s32.totalorder %s33, %s36
    %p45 = scmp.eq.s32.totalorder %s28, 1
    %p46 = por %p44, %p45
    %p47 = scmp.ne.s32.totalorder %s36, %s37
    %p48 = scmp.eq.s32.totalorder %s28, 0
    %p49 = por %p47, %p48
    %p50 = scmp.ne.s32.totalorder %s36, %s37
    %p51 = scmp.eq.s32.totalorder %s29, 1
    %p52 = por %p50, %p51
    %p54 = scmp.ne.s32.totalorder %s37, %s53
    %p55 = scmp.eq.s32.totalorder %s29, 0
    %p56 = por %p54, %p55
    %s58 = sadd.s32 %s57, 1
    %p61 = scmp.eq.s32.totalorder %s23, 1
    %p62 = scmp.ne.s32.totalorder %s57, %s59
    %p63 = scmp.eq.s32.totalorder %s23, 0
    %p64 = por %p62, %p63
    %p65 = scmp.ne.s32.totalorder %s57, %s59
    %p66 = scmp.eq.s32.totalorder %s28, 1
    %p67 = por %p65, %p66
    %p68 = scmp.ne.s32.totalorder %s59, %s60
    %p69 = scmp.eq.s32.totalorder %s28, 0
    %p70 = por %p68, %p69
    %p71 = scmp.ne.s32.totalorder %s59, %s60
    %p72 = scmp.eq.s32.totalorder %s29, 1
    %p73 = por %p71, %p72
    %p75 = scmp.ne.s32.totalorder %s60, %s74
    %p76 = scmp.eq.s32.totalorder %s29, 0
    %p77 = por %p75, %p76
    %s79 = sadd.s32 %s78, 1
    %p82 = scmp.eq.s32.totalorder %s23, 1
    %p83 = scmp.ne.s32.totalorder %s78, %s80
    %p84 = scmp.eq.s32.totalorder %s23, 0
    %p85 = por %p83, %p84
    %p86 = scmp.ne.s32.totalorder %s78, %s80
    %p87 = scmp.eq.s32.totalorder %s28, 1
    %p88 = por %p86, %p87
    %p89 = scmp.ne.s32.totalorder %s80, %s81
    %p90 = scmp.eq.s32.totalorder %s28, 0
    %p91 = por %p89, %p90
    %p92 = scmp.ne.s32.totalorder %s80, %s81
    %p93 = scmp.eq.s32.totalorder %s29, 1
    %p94 = por %p92, %p93
    %p96 = scmp.ne.s32.totalorder %s81, %s95
    %p97 = scmp.eq.s32.totalorder %s29, 0
    %p98 = por %p96, %p97
    %s100 = sadd.s32 %s99, 1
    %p103 = scmp.eq.s32.totalorder %s23, 1
    %p104 = scmp.ne.s32.totalorder %s99, %s101
    %p105 = scmp.eq.s32.totalorder %s23, 0
    %p106 = por %p104, %p105
    %p107 = scmp.ne.s32.totalorder %s99, %s101
    %p108 = scmp.eq.s32.totalorder %s28, 1
    %p109 = por %p107, %p108
    %p110 = scmp.ne.s32.totalorder %s101, %s102
    %p111 = scmp.eq.s32.totalorder %s28, 0
    %p112 = por %p110, %p111
    %p113 = scmp.ne.s32.totalorder %s101, %s102
    %p114 = scmp.eq.s32.totalorder %s29, 1
    %p115 = por %p113, %p114
    %p117 = scmp.ne.s32.totalorder %s102, %s116
    %p118 = scmp.eq.s32.totalorder %s29, 0
    %p119 = por %p117, %p118
    %s121 = sadd.s32 %s120, 1
    %p124 = scmp.eq.s32.totalorder %s23, 1
    %p125 = scmp.ne.s32.totalorder %s120, %s122
    %p126 = scmp.eq.s32.totalorder %s23, 0
    %p127 = por %p125, %p126
    %p128 = scmp.ne.s32.totalorder %s120, %s122
    %p129 = scmp.eq.s32.totalorder %s28, 1
    %p130 = por %p128, %p129
    %p131 = scmp.ne.s32.totalorder %s122, %s123
    %p132 = scmp.eq.s32.totalorder %s28, 0
    %p133 = por %p131, %p132
    %p134 = scmp.ne.s32.totalorder %s122, %s123
    %p135 = scmp.eq.s32.totalorder %s29, 1
    %p136 = por %p134, %p135
    %p138 = scmp.ne.s32.totalorder %s123, %s137
    %p139 = scmp.eq.s32.totalorder %s29, 0
    %p140 = por %p138, %p139
    %s142 = sadd.s32 %s141, 1
    %p145 = scmp.eq.s32.totalorder %s23, 1
    %p146 = scmp.ne.s32.totalorder %s141, %s143
    %p147 = scmp.eq.s32.totalorder %s23, 0
    %p148 = por %p146, %p147
    %p149 = scmp.ne.s32.totalorder %s141, %s143
    %p150 = scmp.eq.s32.totalorder %s28, 1
    %p151 = por %p149, %p150
    %p152 = scmp.ne.s32.totalorder %s143, %s144
    %p153 = scmp.eq.s32.totalorder %s28, 0
    %p154 = por %p152, %p153
    %p155 = scmp.ne.s32.totalorder %s143, %s144
    %p156 = scmp.eq.s32.totalorder %s29, 1
    %p157 = por %p155, %p156
    %p159 = scmp.ne.s32.totalorder %s144, %s158
    %p160 = scmp.eq.s32.totalorder %s29, 0
    %p161 = por %p159, %p160
    %s163 = sadd.s32 %s162, 1
    %p166 = scmp.eq.s32.totalorder %s23, 1
    %p167 = scmp.ne.s32.totalorder %s162, %s164
    %p168 = scmp.eq.s32.totalorder %s23, 0
    %p169 = por %p167, %p168
    %p170 = scmp.ne.s32.totalorder %s162, %s164
    %p171 = scmp.eq.s32.totalorder %s28, 1
    %p172 = por %p170, %p171
    %p173 = scmp.ne.s32.totalorder %s164, %s165
    %p174 = scmp.eq.s32.totalorder %s28, 0
    %p175 = por %p173, %p174
    %p176 = scmp.ne.s32.totalorder %s164, %s165
    %p177 = scmp.eq.s32.totalorder %s29, 1
    %p178 = por %p176, %p177
    %p180 = scmp.ne.s32.totalorder %s165, %s179
    %p181 = scmp.eq.s32.totalorder %s29, 0
    %p182 = por %p180, %p181
    %s184 = sadd.s32 %s183, 1
    %p187 = scmp.eq.s32.totalorder %s23, 1
    %p188 = scmp.ne.s32.totalorder %s183, %s185
    %p189 = scmp.eq.s32.totalorder %s23, 0
    %p190 = por %p188, %p189
    %p191 = scmp.ne.s32.totalorder %s183, %s185
    %p192 = scmp.eq.s32.totalorder %s28, 1
    %p193 = por %p191, %p192
    %p194 = scmp.ne.s32.totalorder %s185, %s186
    %p195 = scmp.eq.s32.totalorder %s28, 0
    %p196 = por %p194, %p195
    %p197 = scmp.ne.s32.totalorder %s185, %s186
    %p198 = scmp.eq.s32.totalorder %s29, 1
    %p199 = por %p197, %p198
    %p201 = scmp.ne.s32.totalorder %s186, %s200
    %p202 = scmp.eq.s32.totalorder %s29, 0
    %p203 = por %p201, %p202
    %s205 = sadd.s32 %s204, 1
    %p208 = scmp.eq.s32.totalorder %s23, 1
    %p209 = scmp.ne.s32.totalorder %s204, %s206
    %p210 = scmp.eq.s32.totalorder %s23, 0
    %p211 = por %p209, %p210
    %p212 = scmp.ne.s32.totalorder %s204, %s206
    %p213 = scmp.eq.s32.totalorder %s28, 1
    %p214 = por %p212, %p213
    %p215 = scmp.ne.s32.totalorder %s206, %s207
    %p216 = scmp.eq.s32.totalorder %s28, 0
    %p217 = por %p215, %p216
    %p218 = scmp.ne.s32.totalorder %s206, %s207
    %p219 = scmp.eq.s32.totalorder %s29, 1
    %p220 = por %p218, %p219
    %p222 = scmp.ne.s32.totalorder %s207, %s221
    %p223 = scmp.eq.s32.totalorder %s29, 0
    %p224 = por %p222, %p223
    %s226 = sadd.s32 %s225, 1
    %p229 = scmp.eq.s32.totalorder %s23, 1
    %p230 = scmp.ne.s32.totalorder %s225, %s227
    %p231 = scmp.eq.s32.totalorder %s23, 0
    %p232 = por %p230, %p231
    %p233 = scmp.ne.s32.totalorder %s225, %s227
    %p234 = scmp.eq.s32.totalorder %s28, 1
    %p235 = por %p233, %p234
    %p236 = scmp.ne.s32.totalorder %s227, %s228
    %p237 = scmp.eq.s32.totalorder %s28, 0
    %p238 = por %p236, %p237
    %p239 = scmp.ne.s32.totalorder %s227, %s228
    %p240 = scmp.eq.s32.totalorder %s29, 1
    %p241 = por %p239, %p240
    %p243 = scmp.ne.s32.totalorder %s228, %s242
    %p244 = scmp.eq.s32.totalorder %s29, 0
    %p245 = por %p243, %p244
    %s247 = sadd.s32 %s246, 1
    %p250 = scmp.eq.s32.totalorder %s23, 1
    %p251 = scmp.ne.s32.totalorder %s246, %s248
    %p252 = scmp.eq.s32.totalorder %s23, 0
    %p253 = por %p251, %p252
    %p254 = scmp.ne.s32.totalorder %s246, %s248
    %p255 = scmp.eq.s32.totalorder %s28, 1
    %p256 = por %p254, %p255
    %p257 = scmp.ne.s32.totalorder %s248, %s249
    %p258 = scmp.eq.s32.totalorder %s28, 0
    %p259 = por %p257, %p258
    %p260 = scmp.ne.s32.totalorder %s248, %s249
    %p261 = scmp.eq.s32.totalorder %s29, 1
    %p262 = por %p260, %p261
    %p264 = scmp.ne.s32.totalorder %s249, %s263
    %p265 = scmp.eq.s32.totalorder %s29, 0
    %p266 = por %p264, %p265
    %s268 = sadd.s32 %s267, 1
    %p271 = scmp.eq.s32.totalorder %s23, 1
    %p272 = scmp.ne.s32.totalorder %s267, %s269
    %p273 = scmp.eq.s32.totalorder %s23, 0
    %p274 = por %p272, %p273
    %p275 = scmp.ne.s32.totalorder %s267, %s269
    %p276 = scmp.eq.s32.totalorder %s28, 1
    %p277 = por %p275, %p276
    %p278 = scmp.ne.s32.totalorder %s269, %s270
    %p279 = scmp.eq.s32.totalorder %s28, 0
    %p280 = por %p278, %p279
    %p281 = scmp.ne.s32.totalorder %s269, %s270
    %p282 = scmp.eq.s32.totalorder %s29, 1
    %p283 = por %p281, %p282
    %p285 = scmp.ne.s32.totalorder %s270, %s284
    %p286 = scmp.eq.s32.totalorder %s29, 0
    %p287 = por %p285, %p286
    %s289 = sadd.s32 %s288, 1
    %p292 = scmp.eq.s32.totalorder %s23, 1
    %p293 = scmp.ne.s32.totalorder %s288, %s290
    %p294 = scmp.eq.s32.totalorder %s23, 0
    %p295 = por %p293, %p294
    %p296 = scmp.ne.s32.totalorder %s288, %s290
    %p297 = scmp.eq.s32.totalorder %s28, 1
    %p298 = por %p296, %p297
    %p299 = scmp.ne.s32.totalorder %s290, %s291
    %p300 = scmp.eq.s32.totalorder %s28, 0
    %p301 = por %p299, %p300
    %p302 = scmp.ne.s32.totalorder %s290, %s291
    %p303 = scmp.eq.s32.totalorder %s29, 1
    %p304 = por %p302, %p303
    %p306 = scmp.ne.s32.totalorder %s291, %s305
    %p307 = scmp.eq.s32.totalorder %s29, 0
    %p308 = por %p306, %p307
    %s310 = sadd.s32 %s309, 1
    %p313 = scmp.eq.s32.totalorder %s23, 1
    %p314 = scmp.ne.s32.totalorder %s309, %s311
    %p315 = scmp.eq.s32.totalorder %s23, 0
    %p316 = por %p314, %p315
    %p317 = scmp.ne.s32.totalorder %s309, %s311
    %p318 = scmp.eq.s32.totalorder %s28, 1
    %p319 = por %p317, %p318
    %p320 = scmp.ne.s32.totalorder %s311, %s312
    %p321 = scmp.eq.s32.totalorder %s28, 0
    %p322 = por %p320, %p321
    %p323 = scmp.ne.s32.totalorder %s311, %s312
    %p324 = scmp.eq.s32.totalorder %s29, 1
    %p325 = por %p323, %p324
    %p327 = scmp.ne.s32.totalorder %s312, %s326
    %p328 = scmp.eq.s32.totalorder %s29, 0
    %p329 = por %p327, %p328
    %s331 = sadd.s32 %s330, 1
    %p334 = scmp.eq.s32.totalorder %s23, 1
    %p335 = scmp.ne.s32.totalorder %s330, %s332
    %p336 = scmp.eq.s32.totalorder %s23, 0
    %p337 = por %p335, %p336
    %p338 = scmp.ne.s32.totalorder %s330, %s332
    %p339 = scmp.eq.s32.totalorder %s28, 1
    %p340 = por %p338, %p339
    %p341 = scmp.ne.s32.totalorder %s332, %s333
    %p342 = scmp.eq.s32.totalorder %s28, 0
    %p343 = por %p341, %p342
    %p344 = scmp.ne.s32.totalorder %s332, %s333
    %p345 = scmp.eq.s32.totalorder %s29, 1
    %p346 = por %p344, %p345
    %p348 = scmp.ne.s32.totalorder %s333, %s347
    %p349 = scmp.eq.s32.totalorder %s29, 0
    %p350 = por %p348, %p349
    %s352 = sadd.s32 %s351, 1
    %p355 = scmp.eq.s32.totalorder %s23, 1
    %p356 = scmp.ne.s32.totalorder %s351, %s353
    %p357 = scmp.eq.s32.totalorder %s23, 0
    %p358 = por %p356, %p357
    %p359 = scmp.ne.s32.totalorder %s351, %s353
    %p360 = scmp.eq.s32.totalorder %s28, 1
    %p361 = por %p359, %p360
    %p362 = scmp.ne.s32.totalorder %s353, %s354
    %p363 = scmp.eq.s32.totalorder %s28, 0
    %p364 = por %p362, %p363
    %p365 = scmp.ne.s32.totalorder %s353, %s354
    %p366 = scmp.eq.s32.totalorder %s29, 1
    %p367 = por %p365, %p366
    %p369 = scmp.ne.s32.totalorder %s354, %s368
    %p370 = scmp.eq.s32.totalorder %s29, 0
    %p371 = por %p369, %p370
    %s373 = sadd.s32 %s372, 1
    %p376 = scmp.eq.s32.totalorder %s23, 1
    %p377 = scmp.ne.s32.totalorder %s372, %s374
    %p378 = scmp.eq.s32.totalorder %s23, 0
    %p379 = por %p377, %p378
    %p380 = scmp.ne.s32.totalorder %s372, %s374
    %p381 = scmp.eq.s32.totalorder %s28, 1
    %p382 = por %p380, %p381
    %p383 = scmp.ne.s32.totalorder %s374, %s375
    %p384 = scmp.eq.s32.totalorder %s28, 0
    %p385 = por %p383, %p384
    %p386 = scmp.ne.s32.totalorder %s374, %s375
    %p387 = scmp.eq.s32.totalorder %s29, 1
    %p388 = por %p386, %p387
    %p390 = scmp.ne.s32.totalorder %s375, %s389
    %p391 = scmp.eq.s32.totalorder %s29, 0
    %p392 = por %p390, %p391
    %s393 = ssub.s32 %s23, %s30
    %p394 = scmp.eq.s32.totalorder %s393, 0
    %s396 = sadd.s32 %s395, 1
    %s397 = scalar_select %p394, %s395, %s396
    %p400 = pneg %p394
    %p401 = scmp.eq.s32.totalorder %s23, 1
    %p402 = por %p400, %p401
    %p403 = scmp.ne.s32.totalorder %s395, %s398
    %p404 = scmp.eq.s32.totalorder %s23, 0
    %p405 = por %p403, %p404
    %p406 = scmp.ne.s32.totalorder %s395, %s398
    %p407 = scmp.eq.s32.totalorder %s28, 1
    %p408 = por %p406, %p407
    %p409 = scmp.ne.s32.totalorder %s398, %s399
    %p410 = scmp.eq.s32.totalorder %s28, 0
    %p411 = por %p409, %p410
    %p412 = scmp.ne.s32.totalorder %s398, %s399
    %p413 = scmp.eq.s32.totalorder %s29, 1
    %p414 = por %p412, %p413
    %p416 = scmp.ne.s32.totalorder %s399, %s415
    %p417 = scmp.eq.s32.totalorder %s29, 0
    %p418 = por %p416, %p417
    %p419 = scmp.le.s32.totalorder 1, %s23
    %p420 = scmp.lt.s32.totalorder %s23, 3
    %p421 = pnand %p419, %p420
    %p422 = pneg %p421
    // Predicated region
    $region9: #{_lambda_.1} parent=5 // pred_check
      _
    $region10: #{_lambda_.1} parent=5 // pred_check_branch
      %424 = sbr.rel (%p421) target = $region12
    $region11: #{_lambda_.1} parent=5 // pred_region
      %s425 = ssub.s32 %s23, 1
      // Predicated region
      $region13: #{_lambda_.1} parent=11 // pred_check
        %p426 = pneg %p70
      $region14: #{_lambda_.1} parent=11 // pred_check_branch
        %428 = sbr.rel (%p426) target = $region16
      $region15: #{_lambda_.1} parent=11 // pred_region
        _
      $region16: #{_lambda_.1} parent=11 // pred_fallthru
        _
      // Predicated region
      $region17: #{_lambda_.1} parent=11 // pred_check
        %p429 = pneg %p91
      $region18: #{_lambda_.1} parent=11 // pred_check_branch
        %431 = sbr.rel (%p429) target = $region20
      $region19: #{_lambda_.1} parent=11 // pred_region
        _
      $region20: #{_lambda_.1} parent=11 // pred_fallthru
        _
      // Predicated region
      $region21: #{_lambda_.1} parent=11 // pred_check
        %p432 = pneg %p112
      $region22: #{_lambda_.1} parent=11 // pred_check_branch
        %434 = sbr.rel (%p432) target = $region24
      $region23: #{_lambda_.1} parent=11 // pred_region
        _
      $region24: #{_lambda_.1} parent=11 // pred_fallthru
        _
      // Predicated region
      $region25: #{_lambda_.1} parent=11 // pred_check
        %p435 = pneg %p133
      $region26: #{_lambda_.1} parent=11 // pred_check_branch
        %437 = sbr.rel (%p435) target = $region28
      $region27: #{_lambda_.1} parent=11 // pred_region
        _
      $region28: #{_lambda_.1} parent=11 // pred_fallthru
        _
      // Predicated region
      $region29: #{_lambda_.1} parent=11 // pred_check
        %p438 = pneg %p154
      $region30: #{_lambda_.1} parent=11 // pred_check_branch
        %440 = sbr.rel (%p438) target = $region32
      $region31: #{_lambda_.1} parent=11 // pred_region
        _
      $region32: #{_lambda_.1} parent=11 // pred_fallthru
        _
      // Predicated region
      $region33: #{_lambda_.1} parent=11 // pred_check
        %p441 = pneg %p175
      $region34: #{_lambda_.1} parent=11 // pred_check_branch
        %443 = sbr.rel (%p441) target = $region36
      $region35: #{_lambda_.1} parent=11 // pred_region
        _
      $region36: #{_lambda_.1} parent=11 // pred_fallthru
        _
      // Predicated region
      $region37: #{_lambda_.1} parent=11 // pred_check
        %p444 = pneg %p196
      $region38: #{_lambda_.1} parent=11 // pred_check_branch
        %446 = sbr.rel (%p444) target = $region40
      $region39: #{_lambda_.1} parent=11 // pred_region
        _
      $region40: #{_lambda_.1} parent=11 // pred_fallthru
        _
      // Predicated region
      $region41: #{_lambda_.1} parent=11 // pred_check
        %p447 = pneg %p217
      $region42: #{_lambda_.1} parent=11 // pred_check_branch
        %449 = sbr.rel (%p447) target = $region44
      $region43: #{_lambda_.1} parent=11 // pred_region
        _
      $region44: #{_lambda_.1} parent=11 // pred_fallthru
        _
      // Predicated region
      $region45: #{_lambda_.1} parent=11 // pred_check
        %p450 = pneg %p238
      $region46: #{_lambda_.1} parent=11 // pred_check_branch
        %452 = sbr.rel (%p450) target = $region48
      $region47: #{_lambda_.1} parent=11 // pred_region
        _
      $region48: #{_lambda_.1} parent=11 // pred_fallthru
        _
      // Predicated region
      $region49: #{_lambda_.1} parent=11 // pred_check
        %p453 = pneg %p259
      $region50: #{_lambda_.1} parent=11 // pred_check_branch
        %455 = sbr.rel (%p453) target = $region52
      $region51: #{_lambda_.1} parent=11 // pred_region
        _
      $region52: #{_lambda_.1} parent=11 // pred_fallthru
        _
      // Predicated region
      $region53: #{_lambda_.1} parent=11 // pred_check
        %p456 = pneg %p280
      $region54: #{_lambda_.1} parent=11 // pred_check_branch
        %458 = sbr.rel (%p456) target = $region56
      $region55: #{_lambda_.1} parent=11 // pred_region
        _
      $region56: #{_lambda_.1} parent=11 // pred_fallthru
        _
      // Predicated region
      $region57: #{_lambda_.1} parent=11 // pred_check
        %p459 = pneg %p301
      $region58: #{_lambda_.1} parent=11 // pred_check_branch
        %461 = sbr.rel (%p459) target = $region60
      $region59: #{_lambda_.1} parent=11 // pred_region
        _
      $region60: #{_lambda_.1} parent=11 // pred_fallthru
        _
      // Predicated region
      $region61: #{_lambda_.1} parent=11 // pred_check
        %p462 = pneg %p322
      $region62: #{_lambda_.1} parent=11 // pred_check_branch
        %464 = sbr.rel (%p462) target = $region64
      $region63: #{_lambda_.1} parent=11 // pred_region
        _
      $region64: #{_lambda_.1} parent=11 // pred_fallthru
        _
      // Predicated region
      $region65: #{_lambda_.1} parent=11 // pred_check
        %p465 = pneg %p343
      $region66: #{_lambda_.1} parent=11 // pred_check_branch
        %467 = sbr.rel (%p465) target = $region68
      $region67: #{_lambda_.1} parent=11 // pred_region
        _
      $region68: #{_lambda_.1} parent=11 // pred_fallthru
        _
      // Predicated region
      $region69: #{_lambda_.1} parent=11 // pred_check
        %p468 = pneg %p364
      $region70: #{_lambda_.1} parent=11 // pred_check_branch
        %470 = sbr.rel (%p468) target = $region72
      $region71: #{_lambda_.1} parent=11 // pred_region
        _
      $region72: #{_lambda_.1} parent=11 // pred_fallthru
        _
      // Predicated region
      $region73: #{_lambda_.1} parent=11 // pred_check
        %p471 = pneg %p385
      $region74: #{_lambda_.1} parent=11 // pred_check_branch
        %473 = sbr.rel (%p471) target = $region76
      $region75: #{_lambda_.1} parent=11 // pred_region
        _
      $region76: #{_lambda_.1} parent=11 // pred_fallthru
        _
    $region12: #{_lambda_.1} parent=5 // pred_fallthru
      _
    %p474 = scmp.lt.s32.totalorder %s23, 2
    // Predicated region
    $region77: #{_lambda_.1} parent=5 // pred_check
      %p475 = pneg %p474
    $region78: #{_lambda_.1} parent=5 // pred_check_branch
      %477 = sbr.rel (%p475) target = $region80
    $region79: #{_lambda_.1} parent=5 // pred_region
      // Predicated region
      $region81: #{_lambda_.1} parent=79 // pred_check
        %p478 = pneg %p43
      $region82: #{_lambda_.1} parent=79 // pred_check_branch
        %480 = sbr.rel (%p478) target = $region84
      $region83: #{_lambda_.1} parent=79 // pred_region
        %p481 = scmp.lt.s32.totalorder %s23, 1
        %s482 = scalar_select %p481, %s23, 1
        %s483 = smul.addr %s482, 4
        %s484 = smul.addr %s483, 4
        %s485 = scalar_lea.vmem %s0, %s484
      $region84: #{_lambda_.1} parent=79 // pred_fallthru
        _
    $region80: #{_lambda_.1} parent=5 // pred_fallthru
      _
    %p486 = scmp.le.s32.totalorder 1, %s23
    %p487 = scmp.lt.s32.totalorder %s23, 3
    %p488 = pnand %p486, %p487
    %p489 = pneg %p488
    // Predicated region
    $region85: #{_lambda_.1} parent=5 // pred_check
      _
    $region86: #{_lambda_.1} parent=5 // pred_check_branch
      %491 = sbr.rel (%p488) target = $region88
    $region87: #{_lambda_.1} parent=5 // pred_region
      %s492 = ssub.s32 %s23, 1
      %p493 = scmp.lt.s32.totalorder %s28, 1
      %s494 = scalar_select %p493, %s28, 1
      %s495 = smul.addr %s494, 4
      %s496 = smul.addr %s495, 4
      %s497 = scalar_lea.vmem %s0, %s496
      %p498 = pneg %p49
      %p499 = pneg %p46
      %p500 = pneg %p70
      %p501 = pneg %p67
      %p502 = pneg %p91
      %p503 = pneg %p88
      %p504 = pneg %p112
      %p505 = pneg %p109
      %p506 = pneg %p133
      %p507 = pneg %p130
      %p508 = pneg %p154
      %p509 = pneg %p151
      %p510 = pneg %p175
      %p511 = pneg %p172
      %p512 = pneg %p196
      %p513 = pneg %p193
      %p514 = pneg %p217
      %p515 = pneg %p214
      %p516 = pneg %p238
      %p517 = pneg %p235
      %p518 = pneg %p259
      %p519 = pneg %p256
      %p520 = pneg %p280
      %p521 = pneg %p277
      %p522 = pneg %p301
      %p523 = pneg %p298
      %p524 = pneg %p322
      %p525 = pneg %p319
      %p526 = pneg %p343
      %p527 = pneg %p340
      %p528 = pneg %p364
      %p529 = pneg %p361
      %p530 = pneg %p385
      %p531 = pneg %p382
      %p532 = pneg %p411
      %p533 = pneg %p408
      %p534 = scmp.lt.s32.totalorder %s28, 1
      %s535 = scalar_select %p534, %s28, 1
      %s536 = smul.addr %s535, 3
      %s537 = smul.addr %s536, 8
      %s538 = scalar_lea.vmem %s17, %s537
      %p539 = scmp.lt.s32.totalorder %s28, 1
      %s540 = scalar_select %p539, %s28, 1
      %s541 = smul.addr %s540, 4
      %s542 = smul.addr %s541, 4
      %s543 = scalar_lea.vmem %s0, %s542
      %p544 = scmp.lt.s32.totalorder %s28, 1
      %s545 = scalar_select %p544, %s28, 1
      %s546 = smul.addr %s545, 3
      %s547 = smul.addr %s546, 8
      %s548 = scalar_lea.vmem %s17, %s547
      %v549 = vlaneseq
      %v550 = vand.u32 %v549, 127
      %vm551 = vcmp.lt.s32.totalorder %v550, 16
      %v552 = vsel %vm551, 1, 0
      %v553 = vcvt.s32.f32 %v552
      %555 = vrot.lane.b32.xlu0 %v553, 24
      %v556 = vpop.permute.xlu0 %555
      %558 = vrot.lane.b32.xlu0 %v553, 48
      %v559 = vpop.permute.xlu0 %558
      %561 = vrot.lane.b32.xlu0 %v553, 72
      %v562 = vpop.permute.xlu0 %561
      %564 = vrot.lane.b32.xlu0 %v553, 96
      %v565 = vpop.permute.xlu0 %564
      %567 = vrot.lane.b32.xlu0 %v553, 120
      %v568 = vpop.permute.xlu0 %567
      %570 = vrot.lane.b32.xlu0 %v553, 16
      %v571 = vpop.permute.xlu0 %570
      %573 = vrot.lane.b32.xlu0 %v553, 40
      %v574 = vpop.permute.xlu0 %573
      %576 = vrot.lane.b32.xlu0 %v553, 64
      %v577 = vpop.permute.xlu0 %576
      %579 = vrot.lane.b32.xlu0 %v553, 88
      %v580 = vpop.permute.xlu0 %579
      %582 = vrot.lane.b32.xlu0 %v553, 112
      %v583 = vpop.permute.xlu0 %582
      %585 = vrot.lane.b32.xlu0 %v553, 8
      %v586 = vpop.permute.xlu0 %585
      %588 = vrot.lane.b32.xlu0 %v553, 32
      %v589 = vpop.permute.xlu0 %588
      %591 = vrot.lane.b32.xlu0 %v553, 56
      %v592 = vpop.permute.xlu0 %591
      %594 = vrot.lane.b32.xlu0 %v553, 80
      %v595 = vpop.permute.xlu0 %594
      %597 = vrot.lane.b32.xlu0 %v553, 104
      %v598 = vpop.permute.xlu0 %597
      %vm600 = vcmask 195584
      %v601 = vsel %vm600, %v553, %v556
      %vm602 = vcmask 392192
      %v603 = vsel %vm602, %v601, %v559
      %vm604 = vcmask 588800
      %v605 = vsel %vm604, %v603, %v562
      %vm606 = vcmask 785408
      %v607 = vsel %vm606, %v605, %v565
      %vm608 = vcmask 982016
      %v609 = vsel %vm608, %v607, %v568
      %vm610 = vcmask 130048
      %v611 = vsel %vm610, %v568, %v571
      %vm612 = vcmask 326656
      %v613 = vsel %vm612, %v611, %v574
      %vm614 = vcmask 523264
      %v615 = vsel %vm614, %v613, %v577
      %vm616 = vcmask 719872
      %v617 = vsel %vm616, %v615, %v580
      %vm618 = vcmask 916480
      %v619 = vsel %vm618, %v617, %v583
      %vm620 = vcmask 64512
      %v621 = vsel %vm620, %v583, %v586
      %vm622 = vcmask 261120
      %v623 = vsel %vm622, %v621, %v589
      %vm624 = vcmask 457728
      %v625 = vsel %vm624, %v623, %v592
      %vm626 = vcmask 654336
      %v627 = vsel %vm626, %v625, %v595
      %vm628 = vcmask 850944
      %v629 = vsel %vm628, %v627, %v598
      %v630 = vld [vmem:[%s543] sm:$0xff]
      %v631 = vld [vmem:[%s543 + $0x8] sm:$0xff]
      %v632 = vld [vmem:[%s1] sm:$0xf]
      %634 = vset.pattern.permute.xlu0 0
      %635 = vperm.xlu0 %634, %v632
      %v636 = vpop.permute.xlu0 %635
      %v638 = vunpack.c.l.s4 839922192
      %v639 = vunpack.c.0.s8 %v638
      %v640 = vlaneseq
      %v641 = vshrl.u32 %v640, 7
      %v642 = vsub.s32 %v639, %v641
      %v643 = vrot.slane %v636, %v642
      %v645 = vmul.f32 %v630, %v643
      %v646 = vmul.f32 %v631, %v643
      %s647 = scalar_lea.vmem %s1, 4
      %v648 = vld [vmem:[%s647] sm:$0xf]
      %650 = vset.pattern.permute.xlu0 0
      %651 = vperm.xlu0 %650, %v648
      %v652 = vpop.permute.xlu0 %651
      %v654 = vunpack.c.l.s4 839922192
      %v655 = vunpack.c.0.s8 %v654
      %v656 = vlaneseq
      %v657 = vshrl.u32 %v656, 7
      %v658 = vsub.s32 %v655, %v657
      %v659 = vrot.slane %v652, %v658
      %v661 = vmul.f32 %v630, %v659
      %v662 = vmul.f32 %v631, %v659
      %665 = vrot.lane.b32.xlu0 %v661, 127
      %v666 = vpop.permute.xlu0 %665
      %667 = vrot.lane.b32.xlu0 %v662, 127
      %v668 = vpop.permute.xlu0 %667
      %v669 = vrot.slane %v666, 4
      %v670 = vrot.slane %v668, 4
      %vm671 = vcmask 1043456
      %v672 = vsel %vm671, %v669, %v670
      %vm673 = vcmask 1039360
      %v674 = vsel %vm673, %v666, %v672
      %v675 = vsel %vm673, %v668, %v670
      %v678 = vadd.f32 %v645, %v674
      %v679 = vadd.f32 %v646, %v675
      %s680 = scalar_lea.vmem %s1, 8
      %v681 = vld [vmem:[%s680] sm:$0xf]
      %683 = vset.pattern.permute.xlu0 0
      %684 = vperm.xlu0 %683, %v681
      %v685 = vpop.permute.xlu0 %684
      %v687 = vunpack.c.l.s4 839922192
      %v688 = vunpack.c.0.s8 %v687
      %v689 = vlaneseq
      %v690 = vshrl.u32 %v689, 7
      %v691 = vsub.s32 %v688, %v690
      %v692 = vrot.slane %v685, %v691
      %v694 = vmul.f32 %v630, %v692
      %v695 = vmul.f32 %v631, %v692
      %698 = vrot.lane.b32.xlu0 %v694, 126
      %v699 = vpop.permute.xlu0 %698
      %700 = vrot.lane.b32.xlu0 %v695, 126
      %v701 = vpop.permute.xlu0 %700
      %v702 = vrot.slane %v699, 4
      %v703 = vrot.slane %v701, 4
      %v704 = vsel %vm671, %v702, %v703
      %vm705 = vcmask 1031168
      %v706 = vsel %vm705, %v699, %v704
      %v707 = vsel %vm705, %v701, %v703
      %v710 = vadd.f32 %v678, %v706
      %v711 = vadd.f32 %v679, %v707
      %s712 = scalar_lea.vmem %s1, 12
      %v713 = vld [vmem:[%s712] sm:$0xf]
      %715 = vset.pattern.permute.xlu0 0
      %716 = vperm.xlu0 %715, %v713
      %v717 = vpop.permute.xlu0 %716
      %v719 = vunpack.c.l.s4 839922192
      %v720 = vunpack.c.0.s8 %v719
      %v721 = vlaneseq
      %v722 = vshrl.u32 %v721, 7
      %v723 = vsub.s32 %v720, %v722
      %v724 = vrot.slane %v717, %v723
      %v726 = vmul.f32 %v630, %v724
      %v727 = vmul.f32 %v631, %v724
      %730 = vrot.lane.b32.xlu0 %v726, 125
      %v731 = vpop.permute.xlu0 %730
      %732 = vrot.lane.b32.xlu0 %v727, 125
      %v733 = vpop.permute.xlu0 %732
      %v734 = vrot.slane %v731, 4
      %v735 = vrot.slane %v733, 4
      %v736 = vsel %vm671, %v734, %v735
      %vm737 = vcmask 1022976
      %v738 = vsel %vm737, %v731, %v736
      %v739 = vsel %vm737, %v733, %v735
      %v742 = vadd.f32 %v710, %v738
      %v743 = vadd.f32 %v711, %v739
      %s744 = scalar_lea.vmem %s1, 16
      %v745 = vld [vmem:[%s744] sm:$0xf]
      %747 = vset.pattern.permute.xlu0 0
      %748 = vperm.xlu0 %747, %v745
      %v749 = vpop.permute.xlu0 %748
      %v751 = vunpack.c.l.s4 839922192
      %v752 = vunpack.c.0.s8 %v751
      %v753 = vlaneseq
      %v754 = vshrl.u32 %v753, 7
      %v755 = vsub.s32 %v752, %v754
      %v756 = vrot.slane %v749, %v755
      %v758 = vmul.f32 %v630, %v756
      %v759 = vmul.f32 %v631, %v756
      %762 = vrot.lane.b32.xlu0 %v758, 124
      %v763 = vpop.permute.xlu0 %762
      %764 = vrot.lane.b32.xlu0 %v759, 124
      %v765 = vpop.permute.xlu0 %764
      %v766 = vrot.slane %v763, 4
      %v767 = vrot.slane %v765, 4
      %v768 = vsel %vm671, %v766, %v767
      %vm769 = vcmask 1014784
      %v770 = vsel %vm769, %v763, %v768
      %v771 = vsel %vm769, %v765, %v767
      %v774 = vadd.f32 %v742, %v770
      %v775 = vadd.f32 %v743, %v771
      %s776 = scalar_lea.vmem %s1, 20
      %v777 = vld [vmem:[%s776] sm:$0xf]
      %779 = vset.pattern.permute.xlu0 0
      %780 = vperm.xlu0 %779, %v777
      %v781 = vpop.permute.xlu0 %780
      %v783 = vunpack.c.l.s4 839922192
      %v784 = vunpack.c.0.s8 %v783
      %v785 = vlaneseq
      %v786 = vshrl.u32 %v785, 7
      %v787 = vsub.s32 %v784, %v786
      %v788 = vrot.slane %v781, %v787
      %v790 = vmul.f32 %v630, %v788
      %v791 = vmul.f32 %v631, %v788
      %794 = vrot.lane.b32.xlu0 %v790, 104
      %v795 = vpop.permute.xlu0 %794
      %796 = vrot.lane.b32.xlu0 %v791, 104
      %v797 = vpop.permute.xlu0 %796
      %v798 = vrot.slane %v795, 4
      %v799 = vrot.slane %v797, 4
      %v800 = vsel %vm671, %v798, %v799
      %v801 = vsel %vm628, %v795, %v800
      %v802 = vsel %vm628, %v797, %v799
      %v805 = vadd.f32 %v774, %v801
      %v806 = vadd.f32 %v775, %v802
      %s807 = scalar_lea.vmem %s1, 24
      %v808 = vld [vmem:[%s807] sm:$0xf]
      %810 = vset.pattern.permute.xlu0 0
      %811 = vperm.xlu0 %810, %v808
      %v812 = vpop.permute.xlu0 %811
      %v814 = vunpack.c.l.s4 839922192
      %v815 = vunpack.c.0.s8 %v814
      %v816 = vlaneseq
      %v817 = vshrl.u32 %v816, 7
      %v818 = vsub.s32 %v815, %v817
      %v819 = vrot.slane %v812, %v818
      %v821 = vmul.f32 %v630, %v819
      %v822 = vmul.f32 %v631, %v819
      %825 = vrot.lane.b32.xlu0 %v821, 103
      %v826 = vpop.permute.xlu0 %825
      %827 = vrot.lane.b32.xlu0 %v822, 103
      %v828 = vpop.permute.xlu0 %827
      %v829 = vrot.slane %v826, 4
      %v830 = vrot.slane %v828, 4
      %v831 = vsel %vm671, %v829, %v830
      %vm832 = vcmask 842752
      %v833 = vsel %vm832, %v826, %v831
      %v834 = vsel %vm832, %v828, %v830
      %v837 = vadd.f32 %v805, %v833
      %v838 = vadd.f32 %v806, %v834
      %s839 = scalar_lea.vmem %s1, 28
      %v840 = vld [vmem:[%s839] sm:$0xf]
      %842 = vset.pattern.permute.xlu0 0
      %843 = vperm.xlu0 %842, %v840
      %v844 = vpop.permute.xlu0 %843
      %v846 = vunpack.c.l.s4 839922192
      %v847 = vunpack.c.0.s8 %v846
      %v848 = vlaneseq
      %v849 = vshrl.u32 %v848, 7
      %v850 = vsub.s32 %v847, %v849
      %v851 = vrot.slane %v844, %v850
      %v853 = vmul.f32 %v630, %v851
      %v854 = vmul.f32 %v631, %v851
      %857 = vrot.lane.b32.xlu0 %v853, 102
      %v858 = vpop.permute.xlu0 %857
      %859 = vrot.lane.b32.xlu0 %v854, 102
      %v860 = vpop.permute.xlu0 %859
      %v861 = vrot.slane %v858, 4
      %v862 = vrot.slane %v860, 4
      %v863 = vsel %vm671, %v861, %v862
      %vm864 = vcmask 834560
      %v865 = vsel %vm864, %v858, %v863
      %v866 = vsel %vm864, %v860, %v862
      %v869 = vadd.f32 %v837, %v865
      %v870 = vadd.f32 %v838, %v866
      %s871 = scalar_lea.vmem %s1, 32
      %v872 = vld [vmem:[%s871] sm:$0xf]
      %874 = vset.pattern.permute.xlu0 0
      %875 = vperm.xlu0 %874, %v872
      %v876 = vpop.permute.xlu0 %875
      %v878 = vunpack.c.l.s4 839922192
      %v879 = vunpack.c.0.s8 %v878
      %v880 = vlaneseq
      %v881 = vshrl.u32 %v880, 7
      %v882 = vsub.s32 %v879, %v881
      %v883 = vrot.slane %v876, %v882
      %v885 = vmul.f32 %v630, %v883
      %v886 = vmul.f32 %v631, %v883
      %889 = vrot.lane.b32.xlu0 %v885, 101
      %v890 = vpop.permute.xlu0 %889
      %891 = vrot.lane.b32.xlu0 %v886, 101
      %v892 = vpop.permute.xlu0 %891
      %v893 = vrot.slane %v890, 4
      %v894 = vrot.slane %v892, 4
      %v895 = vsel %vm671, %v893, %v894
      %vm896 = vcmask 826368
      %v897 = vsel %vm896, %v890, %v895
      %v898 = vsel %vm896, %v892, %v894
      %v901 = vadd.f32 %v869, %v897
      %v902 = vadd.f32 %v870, %v898
      %s903 = scalar_lea.vmem %s1, 36
      %v904 = vld [vmem:[%s903] sm:$0xf]
      %906 = vset.pattern.permute.xlu0 0
      %907 = vperm.xlu0 %906, %v904
      %v908 = vpop.permute.xlu0 %907
      %v910 = vunpack.c.l.s4 839922192
      %v911 = vunpack.c.0.s8 %v910
      %v912 = vlaneseq
      %v913 = vshrl.u32 %v912, 7
      %v914 = vsub.s32 %v911, %v913
      %v915 = vrot.slane %v908, %v914
      %v917 = vmul.f32 %v630, %v915
      %v918 = vmul.f32 %v631, %v915
      %921 = vrot.lane.b32.xlu0 %v917, 100
      %v922 = vpop.permute.xlu0 %921
      %923 = vrot.lane.b32.xlu0 %v918, 100
      %v924 = vpop.permute.xlu0 %923
      %v925 = vrot.slane %v922, 4
      %v926 = vrot.slane %v924, 4
      %v927 = vsel %vm671, %v925, %v926
      %vm928 = vcmask 818176
      %v929 = vsel %vm928, %v922, %v927
      %v930 = vsel %vm928, %v924, %v926
      %v933 = vadd.f32 %v901, %v929
      %v934 = vadd.f32 %v902, %v930
      %s935 = scalar_lea.vmem %s1, 40
      %v936 = vld [vmem:[%s935] sm:$0xf]
      %938 = vset.pattern.permute.xlu0 0
      %939 = vperm.xlu0 %938, %v936
      %v940 = vpop.permute.xlu0 %939
      %v942 = vunpack.c.l.s4 839922192
      %v943 = vunpack.c.0.s8 %v942
      %v944 = vlaneseq
      %v945 = vshrl.u32 %v944, 7
      %v946 = vsub.s32 %v943, %v945
      %v947 = vrot.slane %v940, %v946
      %v949 = vmul.f32 %v630, %v947
      %v950 = vmul.f32 %v631, %v947
      %953 = vrot.lane.b32.xlu0 %v949, 80
      %v954 = vpop.permute.xlu0 %953
      %955 = vrot.lane.b32.xlu0 %v950, 80
      %v956 = vpop.permute.xlu0 %955
      %v957 = vrot.slane %v954, 4
      %v958 = vrot.slane %v956, 4
      %v959 = vsel %vm671, %v957, %v958
      %v960 = vsel %vm626, %v954, %v959
      %v961 = vsel %vm626, %v956, %v958
      %v964 = vadd.f32 %v933, %v960
      %v965 = vadd.f32 %v934, %v961
      %s966 = scalar_lea.vmem %s1, 44
      %v967 = vld [vmem:[%s966] sm:$0xf]
      %969 = vset.pattern.permute.xlu0 0
      %970 = vperm.xlu0 %969, %v967
      %v971 = vpop.permute.xlu0 %970
      %v973 = vunpack.c.l.s4 839922192
      %v974 = vunpack.c.0.s8 %v973
      %v975 = vlaneseq
      %v976 = vshrl.u32 %v975, 7
      %v977 = vsub.s32 %v974, %v976
      %v978 = vrot.slane %v971, %v977
      %v980 = vmul.f32 %v630, %v978
      %v981 = vmul.f32 %v631, %v978
      %984 = vrot.lane.b32.xlu0 %v980, 79
      %v985 = vpop.permute.xlu0 %984
      %986 = vrot.lane.b32.xlu0 %v981, 79
      %v987 = vpop.permute.xlu0 %986
      %v988 = vrot.slane %v985, 4
      %v989 = vrot.slane %v987, 4
      %v990 = vsel %vm671, %v988, %v989
      %vm991 = vcmask 646144
      %v992 = vsel %vm991, %v985, %v990
      %v993 = vsel %vm991, %v987, %v989
      %v996 = vadd.f32 %v964, %v992
      %v997 = vadd.f32 %v965, %v993
      %s998 = scalar_lea.vmem %s1, 48
      %v999 = vld [vmem:[%s998] sm:$0xf]
      %1001 = vset.pattern.permute.xlu0 0
      %1002 = vperm.xlu0 %1001, %v999
      %v1003 = vpop.permute.xlu0 %1002
      %v1005 = vunpack.c.l.s4 839922192
      %v1006 = vunpack.c.0.s8 %v1005
      %v1007 = vlaneseq
      %v1008 = vshrl.u32 %v1007, 7
      %v1009 = vsub.s32 %v1006, %v1008
      %v1010 = vrot.slane %v1003, %v1009
      %v1012 = vmul.f32 %v630, %v1010
      %v1013 = vmul.f32 %v631, %v1010
      %1016 = vrot.lane.b32.xlu0 %v1012, 78
      %v1017 = vpop.permute.xlu0 %1016
      %1018 = vrot.lane.b32.xlu0 %v1013, 78
      %v1019 = vpop.permute.xlu0 %1018
      %v1020 = vrot.slane %v1017, 4
      %v1021 = vrot.slane %v1019, 4
      %v1022 = vsel %vm671, %v1020, %v1021
      %vm1023 = vcmask 637952
      %v1024 = vsel %vm1023, %v1017, %v1022
      %v1025 = vsel %vm1023, %v1019, %v1021
      %v1028 = vadd.f32 %v996, %v1024
      %v1029 = vadd.f32 %v997, %v1025
      %s1030 = scalar_lea.vmem %s1, 52
      %v1031 = vld [vmem:[%s1030] sm:$0xf]
      %1033 = vset.pattern.permute.xlu0 0
      %1034 = vperm.xlu0 %1033, %v1031
      %v1035 = vpop.permute.xlu0 %1034
      %v1037 = vunpack.c.l.s4 839922192
      %v1038 = vunpack.c.0.s8 %v1037
      %v1039 = vlaneseq
      %v1040 = vshrl.u32 %v1039, 7
      %v1041 = vsub.s32 %v1038, %v1040
      %v1042 = vrot.slane %v1035, %v1041
      %v1044 = vmul.f32 %v630, %v1042
      %v1045 = vmul.f32 %v631, %v1042
      %1048 = vrot.lane.b32.xlu0 %v1044, 77
      %v1049 = vpop.permute.xlu0 %1048
      %1050 = vrot.lane.b32.xlu0 %v1045, 77
      %v1051 = vpop.permute.xlu0 %1050
      %v1052 = vrot.slane %v1049, 4
      %v1053 = vrot.slane %v1051, 4
      %v1054 = vsel %vm671, %v1052, %v1053
      %vm1055 = vcmask 629760
      %v1056 = vsel %vm1055, %v1049, %v1054
      %v1057 = vsel %vm1055, %v1051, %v1053
      %v1060 = vadd.f32 %v1028, %v1056
      %v1061 = vadd.f32 %v1029, %v1057
      %s1062 = scalar_lea.vmem %s1, 56
      %v1063 = vld [vmem:[%s1062] sm:$0xf]
      %1065 = vset.pattern.permute.xlu0 0
      %1066 = vperm.xlu0 %1065, %v1063
      %v1067 = vpop.permute.xlu0 %1066
      %v1069 = vunpack.c.l.s4 839922192
      %v1070 = vunpack.c.0.s8 %v1069
      %v1071 = vlaneseq
      %v1072 = vshrl.u32 %v1071, 7
      %v1073 = vsub.s32 %v1070, %v1072
      %v1074 = vrot.slane %v1067, %v1073
      %v1076 = vmul.f32 %v630, %v1074
      %v1077 = vmul.f32 %v631, %v1074
      %1080 = vrot.lane.b32.xlu0 %v1076, 76
      %v1081 = vpop.permute.xlu0 %1080
      %1082 = vrot.lane.b32.xlu0 %v1077, 76
      %v1083 = vpop.permute.xlu0 %1082
      %v1084 = vrot.slane %v1081, 4
      %v1085 = vrot.slane %v1083, 4
      %v1086 = vsel %vm671, %v1084, %v1085
      %vm1087 = vcmask 621568
      %v1088 = vsel %vm1087, %v1081, %v1086
      %v1089 = vsel %vm1087, %v1083, %v1085
      %v1092 = vadd.f32 %v1060, %v1088
      %v1093 = vadd.f32 %v1061, %v1089
      %s1094 = scalar_lea.vmem %s1, 60
      %v1095 = vld [vmem:[%s1094] sm:$0xf]
      %1097 = vset.pattern.permute.xlu0 0
      %1098 = vperm.xlu0 %1097, %v1095
      %v1099 = vpop.permute.xlu0 %1098
      %v1101 = vunpack.c.l.s4 839922192
      %v1102 = vunpack.c.0.s8 %v1101
      %v1103 = vlaneseq
      %v1104 = vshrl.u32 %v1103, 7
      %v1105 = vsub.s32 %v1102, %v1104
      %v1106 = vrot.slane %v1099, %v1105
      %v1108 = vmul.f32 %v630, %v1106
      %v1109 = vmul.f32 %v631, %v1106
      %1112 = vrot.lane.b32.xlu0 %v1108, 56
      %v1113 = vpop.permute.xlu0 %1112
      %1114 = vrot.lane.b32.xlu0 %v1109, 56
      %v1115 = vpop.permute.xlu0 %1114
      %v1116 = vrot.slane %v1113, 4
      %v1117 = vrot.slane %v1115, 4
      %v1118 = vsel %vm671, %v1116, %v1117
      %v1119 = vsel %vm624, %v1113, %v1118
      %v1120 = vsel %vm624, %v1115, %v1117
      %v1123 = vadd.f32 %v1092, %v1119
      %v1124 = vadd.f32 %v1093, %v1120
      %s1125 = scalar_lea.vmem %s1, 64
      %v1126 = vld [vmem:[%s1125] sm:$0xf]
      %1128 = vset.pattern.permute.xlu0 0
      %1129 = vperm.xlu0 %1128, %v1126
      %v1130 = vpop.permute.xlu0 %1129
      %v1132 = vunpack.c.l.s4 839922192
      %v1133 = vunpack.c.0.s8 %v1132
      %v1134 = vlaneseq
      %v1135 = vshrl.u32 %v1134, 7
      %v1136 = vsub.s32 %v1133, %v1135
      %v1137 = vrot.slane %v1130, %v1136
      %v1139 = vmul.f32 %v630, %v1137
      %v1140 = vmul.f32 %v631, %v1137
      %1143 = vrot.lane.b32.xlu0 %v1139, 55
      %v1144 = vpop.permute.xlu0 %1143
      %1145 = vrot.lane.b32.xlu0 %v1140, 55
      %v1146 = vpop.permute.xlu0 %1145
      %v1147 = vrot.slane %v1144, 4
      %v1148 = vrot.slane %v1146, 4
      %v1149 = vsel %vm671, %v1147, %v1148
      %vm1150 = vcmask 449536
      %v1151 = vsel %vm1150, %v1144, %v1149
      %v1152 = vsel %vm1150, %v1146, %v1148
      %v1155 = vadd.f32 %v1123, %v1151
      %v1156 = vadd.f32 %v1124, %v1152
      %s1157 = scalar_lea.vmem %s1, 68
      %v1158 = vld [vmem:[%s1157] sm:$0xf]
      %1160 = vset.pattern.permute.xlu0 0
      %1161 = vperm.xlu0 %1160, %v1158
      %v1162 = vpop.permute.xlu0 %1161
      %v1164 = vunpack.c.l.s4 839922192
      %v1165 = vunpack.c.0.s8 %v1164
      %v1166 = vlaneseq
      %v1167 = vshrl.u32 %v1166, 7
      %v1168 = vsub.s32 %v1165, %v1167
      %v1169 = vrot.slane %v1162, %v1168
      %v1171 = vmul.f32 %v630, %v1169
      %v1172 = vmul.f32 %v631, %v1169
      %1175 = vrot.lane.b32.xlu0 %v1171, 54
      %v1176 = vpop.permute.xlu0 %1175
      %1177 = vrot.lane.b32.xlu0 %v1172, 54
      %v1178 = vpop.permute.xlu0 %1177
      %v1179 = vrot.slane %v1176, 4
      %v1180 = vrot.slane %v1178, 4
      %v1181 = vsel %vm671, %v1179, %v1180
      %vm1182 = vcmask 441344
      %v1183 = vsel %vm1182, %v1176, %v1181
      %v1184 = vsel %vm1182, %v1178, %v1180
      %v1187 = vadd.f32 %v1155, %v1183
      %v1188 = vadd.f32 %v1156, %v1184
      %s1189 = scalar_lea.vmem %s1, 72
      %v1190 = vld [vmem:[%s1189] sm:$0xf]
      %1192 = vset.pattern.permute.xlu0 0
      %1193 = vperm.xlu0 %1192, %v1190
      %v1194 = vpop.permute.xlu0 %1193
      %v1196 = vunpack.c.l.s4 839922192
      %v1197 = vunpack.c.0.s8 %v1196
      %v1198 = vlaneseq
      %v1199 = vshrl.u32 %v1198, 7
      %v1200 = vsub.s32 %v1197, %v1199
      %v1201 = vrot.slane %v1194, %v1200
      %v1203 = vmul.f32 %v630, %v1201
      %v1204 = vmul.f32 %v631, %v1201
      %1207 = vrot.lane.b32.xlu0 %v1203, 53
      %v1208 = vpop.permute.xlu0 %1207
      %1209 = vrot.lane.b32.xlu0 %v1204, 53
      %v1210 = vpop.permute.xlu0 %1209
      %v1211 = vrot.slane %v1208, 4
      %v1212 = vrot.slane %v1210, 4
      %v1213 = vsel %vm671, %v1211, %v1212
      %vm1214 = vcmask 433152
      %v1215 = vsel %vm1214, %v1208, %v1213
      %v1216 = vsel %vm1214, %v1210, %v1212
      %v1219 = vadd.f32 %v1187, %v1215
      %v1220 = vadd.f32 %v1188, %v1216
      %s1221 = scalar_lea.vmem %s1, 76
      %v1222 = vld [vmem:[%s1221] sm:$0xf]
      %1224 = vset.pattern.permute.xlu0 0
      %1225 = vperm.xlu0 %1224, %v1222
      %v1226 = vpop.permute.xlu0 %1225
      %v1228 = vunpack.c.l.s4 839922192
      %v1229 = vunpack.c.0.s8 %v1228
      %v1230 = vlaneseq
      %v1231 = vshrl.u32 %v1230, 7
      %v1232 = vsub.s32 %v1229, %v1231
      %v1233 = vrot.slane %v1226, %v1232
      %v1235 = vmul.f32 %v630, %v1233
      %v1236 = vmul.f32 %v631, %v1233
      %1239 = vrot.lane.b32.xlu0 %v1235, 52
      %v1240 = vpop.permute.xlu0 %1239
      %1241 = vrot.lane.b32.xlu0 %v1236, 52
      %v1242 = vpop.permute.xlu0 %1241
      %v1243 = vrot.slane %v1240, 4
      %v1244 = vrot.slane %v1242, 4
      %v1245 = vsel %vm671, %v1243, %v1244
      %vm1246 = vcmask 424960
      %v1247 = vsel %vm1246, %v1240, %v1245
      %v1248 = vsel %vm1246, %v1242, %v1244
      %v1251 = vadd.f32 %v1219, %v1247
      %v1252 = vadd.f32 %v1220, %v1248
      %s1253 = scalar_lea.vmem %s1, 80
      %v1254 = vld [vmem:[%s1253] sm:$0xf]
      %1256 = vset.pattern.permute.xlu0 0
      %1257 = vperm.xlu0 %1256, %v1254
      %v1258 = vpop.permute.xlu0 %1257
      %v1260 = vunpack.c.l.s4 839922192
      %v1261 = vunpack.c.0.s8 %v1260
      %v1262 = vlaneseq
      %v1263 = vshrl.u32 %v1262, 7
      %v1264 = vsub.s32 %v1261, %v1263
      %v1265 = vrot.slane %v1258, %v1264
      %v1267 = vmul.f32 %v630, %v1265
      %v1268 = vmul.f32 %v631, %v1265
      %1271 = vrot.lane.b32.xlu0 %v1267, 32
      %v1272 = vpop.permute.xlu0 %1271
      %1273 = vrot.lane.b32.xlu0 %v1268, 32
      %v1274 = vpop.permute.xlu0 %1273
      %v1275 = vrot.slane %v1272, 4
      %v1276 = vrot.slane %v1274, 4
      %v1277 = vsel %vm671, %v1275, %v1276
      %v1278 = vsel %vm622, %v1272, %v1277
      %v1279 = vsel %vm622, %v1274, %v1276
      %v1282 = vadd.f32 %v1251, %v1278
      %v1283 = vadd.f32 %v1252, %v1279
      %s1284 = scalar_lea.vmem %s1, 84
      %v1285 = vld [vmem:[%s1284] sm:$0xf]
      %1287 = vset.pattern.permute.xlu0 0
      %1288 = vperm.xlu0 %1287, %v1285
      %v1289 = vpop.permute.xlu0 %1288
      %v1291 = vunpack.c.l.s4 839922192
      %v1292 = vunpack.c.0.s8 %v1291
      %v1293 = vlaneseq
      %v1294 = vshrl.u32 %v1293, 7
      %v1295 = vsub.s32 %v1292, %v1294
      %v1296 = vrot.slane %v1289, %v1295
      %v1298 = vmul.f32 %v630, %v1296
      %v1299 = vmul.f32 %v631, %v1296
      %1302 = vrot.lane.b32.xlu0 %v1298, 31
      %v1303 = vpop.permute.xlu0 %1302
      %1304 = vrot.lane.b32.xlu0 %v1299, 31
      %v1305 = vpop.permute.xlu0 %1304
      %v1306 = vrot.slane %v1303, 4
      %v1307 = vrot.slane %v1305, 4
      %v1308 = vsel %vm671, %v1306, %v1307
      %vm1309 = vcmask 252928
      %v1310 = vsel %vm1309, %v1303, %v1308
      %v1311 = vsel %vm1309, %v1305, %v1307
      %v1314 = vadd.f32 %v1282, %v1310
      %v1315 = vadd.f32 %v1283, %v1311
      %s1316 = scalar_lea.vmem %s1, 88
      %v1317 = vld [vmem:[%s1316] sm:$0xf]
      %1319 = vset.pattern.permute.xlu0 0
      %1320 = vperm.xlu0 %1319, %v1317
      %v1321 = vpop.permute.xlu0 %1320
      %v1323 = vunpack.c.l.s4 839922192
      %v1324 = vunpack.c.0.s8 %v1323
      %v1325 = vlaneseq
      %v1326 = vshrl.u32 %v1325, 7
      %v1327 = vsub.s32 %v1324, %v1326
      %v1328 = vrot.slane %v1321, %v1327
      %v1330 = vmul.f32 %v630, %v1328
      %v1331 = vmul.f32 %v631, %v1328
      %1334 = vrot.lane.b32.xlu0 %v1330, 30
      %v1335 = vpop.permute.xlu0 %1334
      %1336 = vrot.lane.b32.xlu0 %v1331, 30
      %v1337 = vpop.permute.xlu0 %1336
      %v1338 = vrot.slane %v1335, 4
      %v1339 = vrot.slane %v1337, 4
      %v1340 = vsel %vm671, %v1338, %v1339
      %vm1341 = vcmask 244736
      %v1342 = vsel %vm1341, %v1335, %v1340
      %v1343 = vsel %vm1341, %v1337, %v1339
      %v1346 = vadd.f32 %v1314, %v1342
      %v1347 = vadd.f32 %v1315, %v1343
      %s1348 = scalar_lea.vmem %s1, 92
      %v1349 = vld [vmem:[%s1348] sm:$0xf]
      %1351 = vset.pattern.permute.xlu0 0
      %1352 = vperm.xlu0 %1351, %v1349
      %v1353 = vpop.permute.xlu0 %1352
      %v1355 = vunpack.c.l.s4 839922192
      %v1356 = vunpack.c.0.s8 %v1355
      %v1357 = vlaneseq
      %v1358 = vshrl.u32 %v1357, 7
      %v1359 = vsub.s32 %v1356, %v1358
      %v1360 = vrot.slane %v1353, %v1359
      %v1362 = vmul.f32 %v630, %v1360
      %v1363 = vmul.f32 %v631, %v1360
      %1366 = vrot.lane.b32.xlu0 %v1362, 29
      %v1367 = vpop.permute.xlu0 %1366
      %1368 = vrot.lane.b32.xlu0 %v1363, 29
      %v1369 = vpop.permute.xlu0 %1368
      %v1370 = vrot.slane %v1367, 4
      %v1371 = vrot.slane %v1369, 4
      %v1372 = vsel %vm671, %v1370, %v1371
      %vm1373 = vcmask 236544
      %v1374 = vsel %vm1373, %v1367, %v1372
      %v1375 = vsel %vm1373, %v1369, %v1371
      %v1378 = vadd.f32 %v1346, %v1374
      %v1379 = vadd.f32 %v1347, %v1375
      %s1380 = scalar_lea.vmem %s1, 96
      %v1381 = vld [vmem:[%s1380] sm:$0xf]
      %1383 = vset.pattern.permute.xlu0 0
      %1384 = vperm.xlu0 %1383, %v1381
      %v1385 = vpop.permute.xlu0 %1384
      %v1387 = vunpack.c.l.s4 839922192
      %v1388 = vunpack.c.0.s8 %v1387
      %v1389 = vlaneseq
      %v1390 = vshrl.u32 %v1389, 7
      %v1391 = vsub.s32 %v1388, %v1390
      %v1392 = vrot.slane %v1385, %v1391
      %v1394 = vmul.f32 %v630, %v1392
      %v1395 = vmul.f32 %v631, %v1392
      %1398 = vrot.lane.b32.xlu0 %v1394, 28
      %v1399 = vpop.permute.xlu0 %1398
      %1400 = vrot.lane.b32.xlu0 %v1395, 28
      %v1401 = vpop.permute.xlu0 %1400
      %v1402 = vrot.slane %v1399, 4
      %v1403 = vrot.slane %v1401, 4
      %v1404 = vsel %vm671, %v1402, %v1403
      %vm1405 = vcmask 228352
      %v1406 = vsel %vm1405, %v1399, %v1404
      %v1407 = vsel %vm1405, %v1401, %v1403
      %v1410 = vadd.f32 %v1378, %v1406
      %v1411 = vadd.f32 %v1379, %v1407
      %v1412 = vld [vmem:[%s2] sm:$0xf]
      %1414 = vset.pattern.permute.xlu0 0
      %1415 = vperm.xlu0 %1414, %v1412
      %v1416 = vpop.permute.xlu0 %1415
      %v1418 = vunpack.c.l.s4 839922192
      %v1419 = vunpack.c.0.s8 %v1418
      %v1420 = vlaneseq
      %v1421 = vshrl.u32 %v1420, 7
      %v1422 = vsub.s32 %v1419, %v1421
      %v1423 = vrot.slane %v1416, %v1422
      %v1425 = vadd.f32 %v1410, %v1423
      %v1426 = vadd.f32 %v1411, %v1423
      %v1427 = vld [vmem:[%s11] sm:$0xf]
      %v1428 = vld [vmem:[%s12] sm:$0xf]
      %v1429 = vlaneseq
      %v1430 = vshrl.u32 %v1429, 7
      %v1431 = vsub.s32 0, %v1430
      %v1432 = vrot.slane %v609, %v1431
      %v1433 = vlaneseq
      %v1434 = vshrl.u32 %v1433, 7
      %v1435 = vsub.s32 0, %v1434
      %v1436 = vrot.slane %v619, %v1435
      %v1437 = vlaneseq
      %v1438 = vshrl.u32 %v1437, 7
      %v1439 = vsub.s32 0, %v1438
      %v1440 = vrot.slane %v629, %v1439
      %v1443 = vcombine.low %v1432, %v1436
      %v1445 = vmul.f32 %v1425, %v1443
      %v1446 = vmul.f32 %v1426, %v1440
      %v1448 = vcombine.high %v1445, %v1445
      %v1450 = vsel %vm671, %v1445, 0.0
      %v1451 = vsel %vm671, %v1448, 0.0
      %v1452 = vadd.f32 %v1450, %v1451
      %v1453 = vsel %vm671, %v1446, 0.0
      %v1454 = vadd.f32 %v1452, %v1453
      %1455 = vadd.xlane.f32.xlu0 %v1454
      %v1456 = vpop.xlane.xlu0 %1455
      %v1457 = vmul.f32 %v1445, %v1425
      %v1458 = vmul.f32 %v1446, %v1426
      %v1460 = vcombine.high %v1457, %v1457
      %v1462 = vsel %vm671, %v1457, 0.0
      %v1463 = vsel %vm671, %v1460, 0.0
      %v1464 = vadd.f32 %v1462, %v1463
      %v1465 = vsel %vm671, %v1458, 0.0
      %v1466 = vadd.f32 %v1464, %v1465
      %1467 = vadd.xlane.f32.xlu0 %v1466
      %v1468 = vpop.xlane.xlu0 %1467
      %v1469 = vsel %vm671, %v1456, 0.0
      %v1470 = vrot.slane %v1469, 4
      %v1471 = vadd.f32 %v1469, %v1470
      %v1472 = vrot.slane %v1471, 2
      %v1473 = vadd.f32 %v1471, %v1472
      %v1474 = vrot.slane %v1473, 1
      %v1475 = vadd.f32 %v1473, %v1474
      %v1476 = vmul.f32 %v1475, 0.0009765625
      %v1477 = vsel %vm671, %v1468, 0.0
      %v1478 = vrot.slane %v1477, 4
      %v1479 = vadd.f32 %v1477, %v1478
      %v1480 = vrot.slane %v1479, 2
      %v1481 = vadd.f32 %v1479, %v1480
      %v1482 = vrot.slane %v1481, 1
      %v1483 = vadd.f32 %v1481, %v1482
      %v1484 = vmul.f32 %v1483, 0.0009765625
      %v1485 = vmul.f32 %v1476, %v1476
      %v1486 = vsub.f32 %v1484, %v1485
      %v1487 = vadd.f32 %v1486, 1e-05
      %v1488 = vrsqrt.pop %v1487
      %v1489 = vmul.f32 %v1427, %v1488
      %v1490 = vmul.f32 %v1476, %v1489
      %v1491 = vsub.f32 %v1428, %v1490
      %1493 = vset.pattern.permute.xlu0 0
      %1494 = vperm.xlu0 %1493, %v1489
      %v1495 = vpop.permute.xlu0 %1494
      %v1497 = vunpack.c.l.s4 839922192
      %v1498 = vunpack.c.0.s8 %v1497
      %v1499 = vlaneseq
      %v1500 = vshrl.u32 %v1499, 7
      %v1501 = vsub.s32 %v1498, %v1500
      %v1502 = vrot.slane %v1495, %v1501
      %v1504 = vmul.f32 %v1425, %v1502
      %v1505 = vmul.f32 %v1426, %v1502
      %1507 = vset.pattern.permute.xlu0 0
      %1508 = vperm.xlu0 %1507, %v1491
      %v1509 = vpop.permute.xlu0 %1508
      %v1511 = vunpack.c.l.s4 839922192
      %v1512 = vunpack.c.0.s8 %v1511
      %v1513 = vlaneseq
      %v1514 = vshrl.u32 %v1513, 7
      %v1515 = vsub.s32 %v1512, %v1514
      %v1516 = vrot.slane %v1509, %v1515
      %v1518 = vadd.f32 %v1504, %v1516
      %v1519 = vadd.f32 %v1505, %v1516
      %v1520 = vmax.f32 %v1518, 0.0
      %v1521 = vmax.f32 %v1519, 0.0
      %v1522 = vld [vmem:[%s3] sm:$0x3f]
      %1524 = vset.pattern.permute.xlu0 0
      %1525 = vperm.xlu0 %1524, %v1522
      %v1526 = vpop.permute.xlu0 %1525
      %v1530 = vlaneseq
      %v1531 = vshrl.u32 %v1530, 7
      %v1532 = vsub.s32 0, %v1531
      %v1533 = vrot.slane %v1520, %v1532
      %v1534 = vlaneseq
      %v1535 = vshrl.u32 %v1534, 7
      %v1536 = vsub.s32 4, %v1535
      %v1537 = vrot.slane %v1520, %v1536
      %v1538 = vlaneseq
      %v1539 = vshrl.u32 %v1538, 7
      %v1540 = vsub.s32 0, %v1539
      %v1541 = vrot.slane %v1521, %v1540
      %v1545 = vlaneseq
      %v1546 = vshrl.u32 %v1545, 7
      %v1547 = vsub.s32 0, %v1546
      %v1548 = vrot.slane %v1533, %v1547
      %v1549 = vlaneseq
      %v1550 = vshrl.u32 %v1549, 7
      %v1551 = vsub.s32 0, %v1550
      %v1552 = vrot.slane %v1537, %v1551
      %v1553 = vlaneseq
      %v1554 = vshrl.u32 %v1553, 7
      %v1555 = vsub.s32 0, %v1554
      %v1556 = vrot.slane %v1541, %v1555
      %v1557 = vmul.f32 %v1526, %v1548
      %v1558 = vmul.f32 %v1526, %v1552
      %v1559 = vmul.f32 %v1526, %v1556
      %1560 = vset.pattern.permute.xlu0 1
      %1561 = vperm.xlu0 %1560, %v1522
      %v1562 = vpop.permute.xlu0 %1561
      %v1564 = vlaneseq
      %v1565 = vshrl.u32 %v1564, 7
      %v1566 = vsub.s32 1, %v1565
      %v1567 = vrot.slane %v1520, %v1566
      %v1568 = vlaneseq
      %v1569 = vshrl.u32 %v1568, 7
      %v1570 = vsub.s32 5, %v1569
      %v1571 = vrot.slane %v1520, %v1570
      %v1572 = vlaneseq
      %v1573 = vshrl.u32 %v1572, 7
      %v1574 = vsub.s32 1, %v1573
      %v1575 = vrot.slane %v1521, %v1574
      %v1579 = vlaneseq
      %v1580 = vshrl.u32 %v1579, 7
      %v1581 = vsub.s32 1, %v1580
      %v1582 = vrot.slane %v1567, %v1581
      %v1583 = vlaneseq
      %v1584 = vshrl.u32 %v1583, 7
      %v1585 = vsub.s32 1, %v1584
      %v1586 = vrot.slane %v1571, %v1585
      %v1587 = vlaneseq
      %v1588 = vshrl.u32 %v1587, 7
      %v1589 = vsub.s32 1, %v1588
      %v1590 = vrot.slane %v1575, %v1589
      %v1591 = vmul.f32 %v1562, %v1582
      %v1592 = vmul.f32 %v1562, %v1586
      %v1593 = vmul.f32 %v1562, %v1590
      %v1594 = vadd.f32 %v1557, %v1591
      %v1595 = vadd.f32 %v1558, %v1592
      %v1596 = vadd.f32 %v1559, %v1593
      %1597 = vset.pattern.permute.xlu0 2
      %1598 = vperm.xlu0 %1597, %v1522
      %v1599 = vpop.permute.xlu0 %1598
      %v1601 = vlaneseq
      %v1602 = vshrl.u32 %v1601, 7
      %v1603 = vsub.s32 2, %v1602
      %v1604 = vrot.slane %v1520, %v1603
      %v1605 = vlaneseq
      %v1606 = vshrl.u32 %v1605, 7
      %v1607 = vsub.s32 6, %v1606
      %v1608 = vrot.slane %v1520, %v1607
      %v1609 = vlaneseq
      %v1610 = vshrl.u32 %v1609, 7
      %v1611 = vsub.s32 2, %v1610
      %v1612 = vrot.slane %v1521, %v1611
      %v1616 = vlaneseq
      %v1617 = vshrl.u32 %v1616, 7
      %v1618 = vsub.s32 2, %v1617
      %v1619 = vrot.slane %v1604, %v1618
      %v1620 = vlaneseq
      %v1621 = vshrl.u32 %v1620, 7
      %v1622 = vsub.s32 2, %v1621
      %v1623 = vrot.slane %v1608, %v1622
      %v1624 = vlaneseq
      %v1625 = vshrl.u32 %v1624, 7
      %v1626 = vsub.s32 2, %v1625
      %v1627 = vrot.slane %v1612, %v1626
      %v1628 = vmul.f32 %v1599, %v1619
      %v1629 = vmul.f32 %v1599, %v1623
      %v1630 = vmul.f32 %v1599, %v1627
      %v1631 = vadd.f32 %v1594, %v1628
      %v1632 = vadd.f32 %v1595, %v1629
      %v1633 = vadd.f32 %v1596, %v1630
      %1634 = vset.pattern.permute.xlu0 3
      %1635 = vperm.xlu0 %1634, %v1522
      %v1636 = vpop.permute.xlu0 %1635
      %v1638 = vlaneseq
      %v1639 = vshrl.u32 %v1638, 7
      %v1640 = vsub.s32 3, %v1639
      %v1641 = vrot.slane %v1520, %v1640
      %v1642 = vlaneseq
      %v1643 = vshrl.u32 %v1642, 7
      %v1644 = vsub.s32 7, %v1643
      %v1645 = vrot.slane %v1520, %v1644
      %v1646 = vlaneseq
      %v1647 = vshrl.u32 %v1646, 7
      %v1648 = vsub.s32 3, %v1647
      %v1649 = vrot.slane %v1521, %v1648
      %v1653 = vlaneseq
      %v1654 = vshrl.u32 %v1653, 7
      %v1655 = vsub.s32 3, %v1654
      %v1656 = vrot.slane %v1641, %v1655
      %v1657 = vlaneseq
      %v1658 = vshrl.u32 %v1657, 7
      %v1659 = vsub.s32 3, %v1658
      %v1660 = vrot.slane %v1645, %v1659
      %v1661 = vlaneseq
      %v1662 = vshrl.u32 %v1661, 7
      %v1663 = vsub.s32 3, %v1662
      %v1664 = vrot.slane %v1649, %v1663
      %v1665 = vmul.f32 %v1636, %v1656
      %v1666 = vmul.f32 %v1636, %v1660
      %v1667 = vmul.f32 %v1636, %v1664
      %v1668 = vadd.f32 %v1631, %v1665
      %v1669 = vadd.f32 %v1632, %v1666
      %v1670 = vadd.f32 %v1633, %v1667
      %v1671 = vld [vmem:[%s4] sm:$0x3f]
      %1673 = vset.pattern.permute.xlu0 0
      %1674 = vperm.xlu0 %1673, %v1671
      %v1675 = vpop.permute.xlu0 %1674
      %v1677 = vadd.f32 %v1668, %v1675
      %v1678 = vadd.f32 %v1669, %v1675
      %v1679 = vadd.f32 %v1670, %v1675
      %v1680 = vld [vmem:[%s5] sm:$0xf]
      %1682 = vset.pattern.permute.xlu0 0
      %1683 = vperm.xlu0 %1682, %v1680
      %v1684 = vpop.permute.xlu0 %1683
      %v1686 = vlaneseq
      %v1687 = vshrl.u32 %v1686, 7
      %v1688 = vsub.s32 0, %v1687
      %v1689 = vrot.slane %v1677, %v1688
      %v1690 = vlaneseq
      %v1691 = vshrl.u32 %v1690, 7
      %v1692 = vsub.s32 0, %v1691
      %v1693 = vrot.slane %v1678, %v1692
      %v1694 = vlaneseq
      %v1695 = vshrl.u32 %v1694, 7
      %v1696 = vsub.s32 0, %v1695
      %v1697 = vrot.slane %v1679, %v1696
      %v1698 = vmul.f32 %v1684, %v1689
      %v1699 = vmul.f32 %v1684, %v1693
      %v1700 = vmul.f32 %v1684, %v1697
      %1701 = vset.pattern.permute.xlu0 1
      %1702 = vperm.xlu0 %1701, %v1680
      %v1703 = vpop.permute.xlu0 %1702
      %v1705 = vlaneseq
      %v1706 = vshrl.u32 %v1705, 7
      %v1707 = vsub.s32 1, %v1706
      %v1708 = vrot.slane %v1677, %v1707
      %v1709 = vlaneseq
      %v1710 = vshrl.u32 %v1709, 7
      %v1711 = vsub.s32 1, %v1710
      %v1712 = vrot.slane %v1678, %v1711
      %v1713 = vlaneseq
      %v1714 = vshrl.u32 %v1713, 7
      %v1715 = vsub.s32 1, %v1714
      %v1716 = vrot.slane %v1679, %v1715
      %v1717 = vmul.f32 %v1703, %v1708
      %v1718 = vmul.f32 %v1703, %v1712
      %v1719 = vmul.f32 %v1703, %v1716
      %v1720 = vadd.f32 %v1698, %v1717
      %v1721 = vadd.f32 %v1699, %v1718
      %v1722 = vadd.f32 %v1700, %v1719
      %1723 = vset.pattern.permute.xlu0 2
      %1724 = vperm.xlu0 %1723, %v1680
      %v1725 = vpop.permute.xlu0 %1724
      %v1727 = vlaneseq
      %v1728 = vshrl.u32 %v1727, 7
      %v1729 = vsub.s32 2, %v1728
      %v1730 = vrot.slane %v1677, %v1729
      %v1731 = vlaneseq
      %v1732 = vshrl.u32 %v1731, 7
      %v1733 = vsub.s32 2, %v1732
      %v1734 = vrot.slane %v1678, %v1733
      %v1735 = vlaneseq
      %v1736 = vshrl.u32 %v1735, 7
      %v1737 = vsub.s32 2, %v1736
      %v1738 = vrot.slane %v1679, %v1737
      %v1739 = vmul.f32 %v1725, %v1730
      %v1740 = vmul.f32 %v1725, %v1734
      %v1741 = vmul.f32 %v1725, %v1738
      %v1742 = vadd.f32 %v1720, %v1739
      %v1743 = vadd.f32 %v1721, %v1740
      %v1744 = vadd.f32 %v1722, %v1741
      %1745 = vset.pattern.permute.xlu0 3
      %1746 = vperm.xlu0 %1745, %v1680
      %v1747 = vpop.permute.xlu0 %1746
      %v1749 = vlaneseq
      %v1750 = vshrl.u32 %v1749, 7
      %v1751 = vsub.s32 3, %v1750
      %v1752 = vrot.slane %v1677, %v1751
      %v1753 = vlaneseq
      %v1754 = vshrl.u32 %v1753, 7
      %v1755 = vsub.s32 3, %v1754
      %v1756 = vrot.slane %v1678, %v1755
      %v1757 = vlaneseq
      %v1758 = vshrl.u32 %v1757, 7
      %v1759 = vsub.s32 3, %v1758
      %v1760 = vrot.slane %v1679, %v1759
      %v1761 = vmul.f32 %v1747, %v1752
      %v1762 = vmul.f32 %v1747, %v1756
      %v1763 = vmul.f32 %v1747, %v1760
      %v1764 = vadd.f32 %v1742, %v1761
      %v1765 = vadd.f32 %v1743, %v1762
      %v1766 = vadd.f32 %v1744, %v1763
      %1767 = vset.pattern.permute.xlu0 4
      %1768 = vperm.xlu0 %1767, %v1680
      %v1769 = vpop.permute.xlu0 %1768
      %v1771 = vlaneseq
      %v1772 = vshrl.u32 %v1771, 7
      %v1773 = vsub.s32 4, %v1772
      %v1774 = vrot.slane %v1677, %v1773
      %v1775 = vlaneseq
      %v1776 = vshrl.u32 %v1775, 7
      %v1777 = vsub.s32 4, %v1776
      %v1778 = vrot.slane %v1678, %v1777
      %v1779 = vlaneseq
      %v1780 = vshrl.u32 %v1779, 7
      %v1781 = vsub.s32 4, %v1780
      %v1782 = vrot.slane %v1679, %v1781
      %v1783 = vmul.f32 %v1769, %v1774
      %v1784 = vmul.f32 %v1769, %v1778
      %v1785 = vmul.f32 %v1769, %v1782
      %v1786 = vadd.f32 %v1764, %v1783
      %v1787 = vadd.f32 %v1765, %v1784
      %v1788 = vadd.f32 %v1766, %v1785
      %1789 = vset.pattern.permute.xlu0 5
      %1790 = vperm.xlu0 %1789, %v1680
      %v1791 = vpop.permute.xlu0 %1790
      %v1793 = vlaneseq
      %v1794 = vshrl.u32 %v1793, 7
      %v1795 = vsub.s32 5, %v1794
      %v1796 = vrot.slane %v1677, %v1795
      %v1797 = vlaneseq
      %v1798 = vshrl.u32 %v1797, 7
      %v1799 = vsub.s32 5, %v1798
      %v1800 = vrot.slane %v1678, %v1799
      %v1801 = vlaneseq
      %v1802 = vshrl.u32 %v1801, 7
      %v1803 = vsub.s32 5, %v1802
      %v1804 = vrot.slane %v1679, %v1803
      %v1805 = vmul.f32 %v1791, %v1796
      %v1806 = vmul.f32 %v1791, %v1800
      %v1807 = vmul.f32 %v1791, %v1804
      %v1808 = vadd.f32 %v1786, %v1805
      %v1809 = vadd.f32 %v1787, %v1806
      %v1810 = vadd.f32 %v1788, %v1807
      %v1811 = vld [vmem:[%s6] sm:$0xf]
      %1813 = vset.pattern.permute.xlu0 0
      %1814 = vperm.xlu0 %1813, %v1811
      %v1815 = vpop.permute.xlu0 %1814
      %v1817 = vadd.f32 %v1808, %v1815
      %v1818 = vadd.f32 %v1809, %v1815
      %v1819 = vadd.f32 %v1810, %v1815
      %v1822 = vcombine.low %v1817, %v1818
      %v1824 = vadd.f32 %v1520, %v1822
      %v1825 = vadd.f32 %v1521, %v1819
      %v1826 = vld [vmem:[%s13] sm:$0xf]
      %v1827 = vld [vmem:[%s14] sm:$0xf]
      %v1828 = vmul.f32 %v1824, %v1443
      %v1829 = vmul.f32 %v1825, %v1440
      %v1831 = vcombine.high %v1828, %v1828
      %v1833 = vsel %vm671, %v1828, 0.0
      %v1834 = vsel %vm671, %v1831, 0.0
      %v1835 = vadd.f32 %v1833, %v1834
      %v1836 = vsel %vm671, %v1829, 0.0
      %v1837 = vadd.f32 %v1835, %v1836
      %1838 = vadd.xlane.f32.xlu0 %v1837
      %v1839 = vpop.xlane.xlu0 %1838
      %v1840 = vmul.f32 %v1828, %v1824
      %v1841 = vmul.f32 %v1829, %v1825
      %v1843 = vcombine.high %v1840, %v1840
      %v1845 = vsel %vm671, %v1840, 0.0
      %v1846 = vsel %vm671, %v1843, 0.0
      %v1847 = vadd.f32 %v1845, %v1846
      %v1848 = vsel %vm671, %v1841, 0.0
      %v1849 = vadd.f32 %v1847, %v1848
      %1850 = vadd.xlane.f32.xlu0 %v1849
      %v1851 = vpop.xlane.xlu0 %1850
      %v1852 = vsel %vm671, %v1839, 0.0
      %v1853 = vrot.slane %v1852, 4
      %v1854 = vadd.f32 %v1852, %v1853
      %v1855 = vrot.slane %v1854, 2
      %v1856 = vadd.f32 %v1854, %v1855
      %v1857 = vrot.slane %v1856, 1
      %v1858 = vadd.f32 %v1856, %v1857
      %v1859 = vmul.f32 %v1858, 0.0009765625
      %v1860 = vsel %vm671, %v1851, 0.0
      %v1861 = vrot.slane %v1860, 4
      %v1862 = vadd.f32 %v1860, %v1861
      %v1863 = vrot.slane %v1862, 2
      %v1864 = vadd.f32 %v1862, %v1863
      %v1865 = vrot.slane %v1864, 1
      %v1866 = vadd.f32 %v1864, %v1865
      %v1867 = vmul.f32 %v1866, 0.0009765625
      %v1868 = vmul.f32 %v1859, %v1859
      %v1869 = vsub.f32 %v1867, %v1868
      %v1870 = vadd.f32 %v1869, 1e-05
      %v1871 = vrsqrt.pop %v1870
      %v1872 = vmul.f32 %v1826, %v1871
      %v1873 = vmul.f32 %v1859, %v1872
      %v1874 = vsub.f32 %v1827, %v1873
      %1876 = vset.pattern.permute.xlu0 0
      %1877 = vperm.xlu0 %1876, %v1872
      %v1878 = vpop.permute.xlu0 %1877
      %v1880 = vunpack.c.l.s4 839922192
      %v1881 = vunpack.c.0.s8 %v1880
      %v1882 = vlaneseq
      %v1883 = vshrl.u32 %v1882, 7
      %v1884 = vsub.s32 %v1881, %v1883
      %v1885 = vrot.slane %v1878, %v1884
      %v1887 = vmul.f32 %v1824, %v1885
      %v1888 = vmul.f32 %v1825, %v1885
      %1890 = vset.pattern.permute.xlu0 0
      %1891 = vperm.xlu0 %1890, %v1874
      %v1892 = vpop.permute.xlu0 %1891
      %v1894 = vunpack.c.l.s4 839922192
      %v1895 = vunpack.c.0.s8 %v1894
      %v1896 = vlaneseq
      %v1897 = vshrl.u32 %v1896, 7
      %v1898 = vsub.s32 %v1895, %v1897
      %v1899 = vrot.slane %v1892, %v1898
      %v1901 = vadd.f32 %v1887, %v1899
      %v1902 = vadd.f32 %v1888, %v1899
      %v1903 = vmax.f32 %v1901, 0.0
      %v1904 = vmax.f32 %v1902, 0.0
      %v1905 = vld [vmem:[%s7] sm:$0x3f]
      %1907 = vset.pattern.permute.xlu0 0
      %1908 = vperm.xlu0 %1907, %v1905
      %v1909 = vpop.permute.xlu0 %1908
      %v1913 = vlaneseq
      %v1914 = vshrl.u32 %v1913, 7
      %v1915 = vsub.s32 0, %v1914
      %v1916 = vrot.slane %v1903, %v1915
      %v1917 = vlaneseq
      %v1918 = vshrl.u32 %v1917, 7
      %v1919 = vsub.s32 4, %v1918
      %v1920 = vrot.slane %v1903, %v1919
      %v1921 = vlaneseq
      %v1922 = vshrl.u32 %v1921, 7
      %v1923 = vsub.s32 0, %v1922
      %v1924 = vrot.slane %v1904, %v1923
      %v1928 = vlaneseq
      %v1929 = vshrl.u32 %v1928, 7
      %v1930 = vsub.s32 0, %v1929
      %v1931 = vrot.slane %v1916, %v1930
      %v1932 = vlaneseq
      %v1933 = vshrl.u32 %v1932, 7
      %v1934 = vsub.s32 0, %v1933
      %v1935 = vrot.slane %v1920, %v1934
      %v1936 = vlaneseq
      %v1937 = vshrl.u32 %v1936, 7
      %v1938 = vsub.s32 0, %v1937
      %v1939 = vrot.slane %v1924, %v1938
      %v1940 = vmul.f32 %v1909, %v1931
      %v1941 = vmul.f32 %v1909, %v1935
      %v1942 = vmul.f32 %v1909, %v1939
      %1943 = vset.pattern.permute.xlu0 1
      %1944 = vperm.xlu0 %1943, %v1905
      %v1945 = vpop.permute.xlu0 %1944
      %v1947 = vlaneseq
      %v1948 = vshrl.u32 %v1947, 7
      %v1949 = vsub.s32 1, %v1948
      %v1950 = vrot.slane %v1903, %v1949
      %v1951 = vlaneseq
      %v1952 = vshrl.u32 %v1951, 7
      %v1953 = vsub.s32 5, %v1952
      %v1954 = vrot.slane %v1903, %v1953
      %v1955 = vlaneseq
      %v1956 = vshrl.u32 %v1955, 7
      %v1957 = vsub.s32 1, %v1956
      %v1958 = vrot.slane %v1904, %v1957
      %v1962 = vlaneseq
      %v1963 = vshrl.u32 %v1962, 7
      %v1964 = vsub.s32 1, %v1963
      %v1965 = vrot.slane %v1950, %v1964
      %v1966 = vlaneseq
      %v1967 = vshrl.u32 %v1966, 7
      %v1968 = vsub.s32 1, %v1967
      %v1969 = vrot.slane %v1954, %v1968
      %v1970 = vlaneseq
      %v1971 = vshrl.u32 %v1970, 7
      %v1972 = vsub.s32 1, %v1971
      %v1973 = vrot.slane %v1958, %v1972
      %v1974 = vmul.f32 %v1945, %v1965
      %v1975 = vmul.f32 %v1945, %v1969
      %v1976 = vmul.f32 %v1945, %v1973
      %v1977 = vadd.f32 %v1940, %v1974
      %v1978 = vadd.f32 %v1941, %v1975
      %v1979 = vadd.f32 %v1942, %v1976
      %1980 = vset.pattern.permute.xlu0 2
      %1981 = vperm.xlu0 %1980, %v1905
      %v1982 = vpop.permute.xlu0 %1981
      %v1984 = vlaneseq
      %v1985 = vshrl.u32 %v1984, 7
      %v1986 = vsub.s32 2, %v1985
      %v1987 = vrot.slane %v1903, %v1986
      %v1988 = vlaneseq
      %v1989 = vshrl.u32 %v1988, 7
      %v1990 = vsub.s32 6, %v1989
      %v1991 = vrot.slane %v1903, %v1990
      %v1992 = vlaneseq
      %v1993 = vshrl.u32 %v1992, 7
      %v1994 = vsub.s32 2, %v1993
      %v1995 = vrot.slane %v1904, %v1994
      %v1999 = vlaneseq
      %v2000 = vshrl.u32 %v1999, 7
      %v2001 = vsub.s32 2, %v2000
      %v2002 = vrot.slane %v1987, %v2001
      %v2003 = vlaneseq
      %v2004 = vshrl.u32 %v2003, 7
      %v2005 = vsub.s32 2, %v2004
      %v2006 = vrot.slane %v1991, %v2005
      %v2007 = vlaneseq
      %v2008 = vshrl.u32 %v2007, 7
      %v2009 = vsub.s32 2, %v2008
      %v2010 = vrot.slane %v1995, %v2009
      %v2011 = vmul.f32 %v1982, %v2002
      %v2012 = vmul.f32 %v1982, %v2006
      %v2013 = vmul.f32 %v1982, %v2010
      %v2014 = vadd.f32 %v1977, %v2011
      %v2015 = vadd.f32 %v1978, %v2012
      %v2016 = vadd.f32 %v1979, %v2013
      %2017 = vset.pattern.permute.xlu0 3
      %2018 = vperm.xlu0 %2017, %v1905
      %v2019 = vpop.permute.xlu0 %2018
      %v2021 = vlaneseq
      %v2022 = vshrl.u32 %v2021, 7
      %v2023 = vsub.s32 3, %v2022
      %v2024 = vrot.slane %v1903, %v2023
      %v2025 = vlaneseq
      %v2026 = vshrl.u32 %v2025, 7
      %v2027 = vsub.s32 7, %v2026
      %v2028 = vrot.slane %v1903, %v2027
      %v2029 = vlaneseq
      %v2030 = vshrl.u32 %v2029, 7
      %v2031 = vsub.s32 3, %v2030
      %v2032 = vrot.slane %v1904, %v2031
      %v2036 = vlaneseq
      %v2037 = vshrl.u32 %v2036, 7
      %v2038 = vsub.s32 3, %v2037
      %v2039 = vrot.slane %v2024, %v2038
      %v2040 = vlaneseq
      %v2041 = vshrl.u32 %v2040, 7
      %v2042 = vsub.s32 3, %v2041
      %v2043 = vrot.slane %v2028, %v2042
      %v2044 = vlaneseq
      %v2045 = vshrl.u32 %v2044, 7
      %v2046 = vsub.s32 3, %v2045
      %v2047 = vrot.slane %v2032, %v2046
      %v2048 = vmul.f32 %v2019, %v2039
      %v2049 = vmul.f32 %v2019, %v2043
      %v2050 = vmul.f32 %v2019, %v2047
      %v2051 = vadd.f32 %v2014, %v2048
      %v2052 = vadd.f32 %v2015, %v2049
      %v2053 = vadd.f32 %v2016, %v2050
      %v2054 = vld [vmem:[%s8] sm:$0x3f]
      %2056 = vset.pattern.permute.xlu0 0
      %2057 = vperm.xlu0 %2056, %v2054
      %v2058 = vpop.permute.xlu0 %2057
      %v2060 = vadd.f32 %v2051, %v2058
      %v2061 = vadd.f32 %v2052, %v2058
      %v2062 = vadd.f32 %v2053, %v2058
      %v2063 = vld [vmem:[%s9] sm:$0xff]
      %2065 = vset.pattern.permute.xlu0 0
      %2066 = vperm.xlu0 %2065, %v2063
      %v2067 = vpop.permute.xlu0 %2066
      %v2069 = vlaneseq
      %v2070 = vshrl.u32 %v2069, 7
      %v2071 = vsub.s32 0, %v2070
      %v2072 = vrot.slane %v2060, %v2071
      %v2073 = vlaneseq
      %v2074 = vshrl.u32 %v2073, 7
      %v2075 = vsub.s32 0, %v2074
      %v2076 = vrot.slane %v2061, %v2075
      %v2077 = vlaneseq
      %v2078 = vshrl.u32 %v2077, 7
      %v2079 = vsub.s32 0, %v2078
      %v2080 = vrot.slane %v2062, %v2079
      %v2081 = vmul.f32 %v2067, %v2072
      %v2082 = vmul.f32 %v2067, %v2076
      %v2083 = vmul.f32 %v2067, %v2080
      %2084 = vset.pattern.permute.xlu0 1
      %2085 = vperm.xlu0 %2084, %v2063
      %v2086 = vpop.permute.xlu0 %2085
      %v2088 = vlaneseq
      %v2089 = vshrl.u32 %v2088, 7
      %v2090 = vsub.s32 1, %v2089
      %v2091 = vrot.slane %v2060, %v2090
      %v2092 = vlaneseq
      %v2093 = vshrl.u32 %v2092, 7
      %v2094 = vsub.s32 1, %v2093
      %v2095 = vrot.slane %v2061, %v2094
      %v2096 = vlaneseq
      %v2097 = vshrl.u32 %v2096, 7
      %v2098 = vsub.s32 1, %v2097
      %v2099 = vrot.slane %v2062, %v2098
      %v2100 = vmul.f32 %v2086, %v2091
      %v2101 = vmul.f32 %v2086, %v2095
      %v2102 = vmul.f32 %v2086, %v2099
      %v2103 = vadd.f32 %v2081, %v2100
      %v2104 = vadd.f32 %v2082, %v2101
      %v2105 = vadd.f32 %v2083, %v2102
      %2106 = vset.pattern.permute.xlu0 2
      %2107 = vperm.xlu0 %2106, %v2063
      %v2108 = vpop.permute.xlu0 %2107
      %v2110 = vlaneseq
      %v2111 = vshrl.u32 %v2110, 7
      %v2112 = vsub.s32 2, %v2111
      %v2113 = vrot.slane %v2060, %v2112
      %v2114 = vlaneseq
      %v2115 = vshrl.u32 %v2114, 7
      %v2116 = vsub.s32 2, %v2115
      %v2117 = vrot.slane %v2061, %v2116
      %v2118 = vlaneseq
      %v2119 = vshrl.u32 %v2118, 7
      %v2120 = vsub.s32 2, %v2119
      %v2121 = vrot.slane %v2062, %v2120
      %v2122 = vmul.f32 %v2108, %v2113
      %v2123 = vmul.f32 %v2108, %v2117
      %v2124 = vmul.f32 %v2108, %v2121
      %v2125 = vadd.f32 %v2103, %v2122
      %v2126 = vadd.f32 %v2104, %v2123
      %v2127 = vadd.f32 %v2105, %v2124
      %2128 = vset.pattern.permute.xlu0 3
      %2129 = vperm.xlu0 %2128, %v2063
      %v2130 = vpop.permute.xlu0 %2129
      %v2132 = vlaneseq
      %v2133 = vshrl.u32 %v2132, 7
      %v2134 = vsub.s32 3, %v2133
      %v2135 = vrot.slane %v2060, %v2134
      %v2136 = vlaneseq
      %v2137 = vshrl.u32 %v2136, 7
      %v2138 = vsub.s32 3, %v2137
      %v2139 = vrot.slane %v2061, %v2138
      %v2140 = vlaneseq
      %v2141 = vshrl.u32 %v2140, 7
      %v2142 = vsub.s32 3, %v2141
      %v2143 = vrot.slane %v2062, %v2142
      %v2144 = vmul.f32 %v2130, %v2135
      %v2145 = vmul.f32 %v2130, %v2139
      %v2146 = vmul.f32 %v2130, %v2143
      %v2147 = vadd.f32 %v2125, %v2144
      %v2148 = vadd.f32 %v2126, %v2145
      %v2149 = vadd.f32 %v2127, %v2146
      %2150 = vset.pattern.permute.xlu0 4
      %2151 = vperm.xlu0 %2150, %v2063
      %v2152 = vpop.permute.xlu0 %2151
      %v2154 = vlaneseq
      %v2155 = vshrl.u32 %v2154, 7
      %v2156 = vsub.s32 4, %v2155
      %v2157 = vrot.slane %v2060, %v2156
      %v2158 = vlaneseq
      %v2159 = vshrl.u32 %v2158, 7
      %v2160 = vsub.s32 4, %v2159
      %v2161 = vrot.slane %v2061, %v2160
      %v2162 = vlaneseq
      %v2163 = vshrl.u32 %v2162, 7
      %v2164 = vsub.s32 4, %v2163
      %v2165 = vrot.slane %v2062, %v2164
      %v2166 = vmul.f32 %v2152, %v2157
      %v2167 = vmul.f32 %v2152, %v2161
      %v2168 = vmul.f32 %v2152, %v2165
      %v2169 = vadd.f32 %v2147, %v2166
      %v2170 = vadd.f32 %v2148, %v2167
      %v2171 = vadd.f32 %v2149, %v2168
      %2172 = vset.pattern.permute.xlu0 5
      %2173 = vperm.xlu0 %2172, %v2063
      %v2174 = vpop.permute.xlu0 %2173
      %v2176 = vlaneseq
      %v2177 = vshrl.u32 %v2176, 7
      %v2178 = vsub.s32 5, %v2177
      %v2179 = vrot.slane %v2060, %v2178
      %v2180 = vlaneseq
      %v2181 = vshrl.u32 %v2180, 7
      %v2182 = vsub.s32 5, %v2181
      %v2183 = vrot.slane %v2061, %v2182
      %v2184 = vlaneseq
      %v2185 = vshrl.u32 %v2184, 7
      %v2186 = vsub.s32 5, %v2185
      %v2187 = vrot.slane %v2062, %v2186
      %v2188 = vmul.f32 %v2174, %v2179
      %v2189 = vmul.f32 %v2174, %v2183
      %v2190 = vmul.f32 %v2174, %v2187
      %v2191 = vadd.f32 %v2169, %v2188
      %v2192 = vadd.f32 %v2170, %v2189
      %v2193 = vadd.f32 %v2171, %v2190
      %v2194 = vld [vmem:[%s10] sm:$0xff]
      %2196 = vset.pattern.permute.xlu0 0
      %2197 = vperm.xlu0 %2196, %v2194
      %v2198 = vpop.permute.xlu0 %2197
      %v2200 = vadd.f32 %v2191, %v2198
      %v2201 = vadd.f32 %v2192, %v2198
      %v2202 = vadd.f32 %v2193, %v2198
      %v2203 = vld [vmem:[%s15] sm:$0xff]
      %v2204 = vld [vmem:[%s16] sm:$0xff]
      %v2205 = vmul.f32 %v2200, %v1432
      %v2206 = vmul.f32 %v2201, %v1436
      %v2207 = vmul.f32 %v2202, %v1440
      %v2208 = vadd.f32 %v2205, %v2206
      %v2209 = vadd.f32 %v2208, %v2207
      %2210 = vadd.xlane.f32.xlu0 %v2209
      %v2211 = vpop.xlane.xlu0 %2210
      %v2212 = vmul.f32 %v2205, %v2200
      %v2213 = vmul.f32 %v2206, %v2201
      %v2214 = vmul.f32 %v2207, %v2202
      %v2215 = vadd.f32 %v2212, %v2213
      %v2216 = vadd.f32 %v2215, %v2214
      %2217 = vadd.xlane.f32.xlu0 %v2216
      %v2218 = vpop.xlane.xlu0 %2217
      %v2219 = vsel %vm671, %v2211, 0.0
      %v2220 = vrot.slane %v2219, 4
      %v2221 = vadd.f32 %v2219, %v2220
      %v2222 = vrot.slane %v2221, 2
      %v2223 = vadd.f32 %v2221, %v2222
      %v2224 = vrot.slane %v2223, 1
      %v2225 = vadd.f32 %v2223, %v2224
      %v2226 = vmul.f32 %v2225, 0.0009765625
      %v2227 = vsel %vm671, %v2218, 0.0
      %v2228 = vrot.slane %v2227, 4
      %v2229 = vadd.f32 %v2227, %v2228
      %v2230 = vrot.slane %v2229, 2
      %v2231 = vadd.f32 %v2229, %v2230
      %v2232 = vrot.slane %v2231, 1
      %v2233 = vadd.f32 %v2231, %v2232
      %v2234 = vmul.f32 %v2233, 0.0009765625
      %v2235 = vmul.f32 %v2226, %v2226
      %v2236 = vsub.f32 %v2234, %v2235
      %v2237 = vadd.f32 %v2236, 1e-05
      %v2238 = vrsqrt.pop %v2237
      %v2239 = vmul.f32 %v2203, %v2238
      %v2240 = vmul.f32 %v2226, %v2239
      %v2241 = vsub.f32 %v2204, %v2240
      %v2243 = vrot.slane %v2211, 4
      %v2245 = vsel %vm671, %v2243, 0.0
      %v2246 = vrot.slane %v2245, 4
      %v2247 = vadd.f32 %v2245, %v2246
      %v2248 = vrot.slane %v2247, 2
      %v2249 = vadd.f32 %v2247, %v2248
      %v2250 = vrot.slane %v2249, 1
      %v2251 = vadd.f32 %v2249, %v2250
      %v2252 = vmul.f32 %v2251, 0.0009765625
      %v2254 = vrot.slane %v2218, 4
      %v2256 = vsel %vm671, %v2254, 0.0
      %v2257 = vrot.slane %v2256, 4
      %v2258 = vadd.f32 %v2256, %v2257
      %v2259 = vrot.slane %v2258, 2
      %v2260 = vadd.f32 %v2258, %v2259
      %v2261 = vrot.slane %v2260, 1
      %v2262 = vadd.f32 %v2260, %v2261
      %v2263 = vmul.f32 %v2262, 0.0009765625
      %v2264 = vmul.f32 %v2252, %v2252
      %v2265 = vsub.f32 %v2263, %v2264
      %v2266 = vadd.f32 %v2265, 1e-05
      %v2267 = vrsqrt.pop %v2266
      %v2268 = vmul.f32 %v2203, %v2267
      %v2269 = vmul.f32 %v2252, %v2268
      %v2270 = vsub.f32 %v2204, %v2269
      %v2271 = vsel %vm671, %v2239, %v2268
      %v2272 = vsel %vm671, %v2241, %v2270
      %2274 = vset.pattern.permute.xlu0 0
      %2275 = vperm.xlu0 %2274, %v2271
      %v2276 = vpop.permute.xlu0 %2275
      %v2278 = vmul.f32 %v2200, %v2276
      %v2279 = vmul.f32 %v2201, %v2276
      %v2280 = vmul.f32 %v2202, %v2276
      %2282 = vset.pattern.permute.xlu0 0
      %2283 = vperm.xlu0 %2282, %v2272
      %v2284 = vpop.permute.xlu0 %2283
      %v2286 = vadd.f32 %v2278, %v2284
      %v2287 = vadd.f32 %v2279, %v2284
      %v2288 = vadd.f32 %v2280, %v2284
      %2289 = vst [vmem:[%s548] sm:$0xff] %v2286
      %2290 = vst [vmem:[%s548 + $0x8] sm:$0xff] %v2287
      %2291 = vst [vmem:[%s548 + $0x10] sm:$0xff] %v2288
      %p2292 = scmp.lt.s32.totalorder %s28, 1
      %s2293 = scalar_select %p2292, %s28, 1
      %s2294 = smul.addr %s2293, 3
      %s2295 = smul.addr %s2294, 8
      %s2296 = scalar_lea.vmem %s17, %s2295
      // Predicated region
      $region89: #{_lambda_.1} parent=87 // pred_check
        %p2297 = pneg %p408
      $region90: #{_lambda_.1} parent=87 // pred_check_branch
        %2299 = sbr.rel (%p2297) target = $region92
      $region91: #{_lambda_.1} parent=87 // pred_region
        _
      $region92: #{_lambda_.1} parent=87 // pred_fallthru
        _
    $region88: #{_lambda_.1} parent=5 // pred_fallthru
      _
    %p2300 = scmp.le.s32.totalorder 2, %s23
    // Predicated region
    $region93: #{_lambda_.1} parent=5 // pred_check
      %p2301 = pneg %p2300
    $region94: #{_lambda_.1} parent=5 // pred_check_branch
      %2303 = sbr.rel (%p2301) target = $region96
    $region95: #{_lambda_.1} parent=5 // pred_region
      %s2304 = ssub.s32 %s23, 2
      // Predicated region
      $region97: #{_lambda_.1} parent=95 // pred_check
        %p2305 = pneg %p414
      $region98: #{_lambda_.1} parent=95 // pred_check_branch
        %2307 = sbr.rel (%p2305) target = $region100
      $region99: #{_lambda_.1} parent=95 // pred_region
        %p2308 = scmp.lt.s32.totalorder %s29, 1
        %s2309 = scalar_select %p2308, %s29, 1
        %s2310 = smul.addr %s2309, 3
        %s2311 = smul.addr %s2310, 8
        %s2312 = scalar_lea.vmem %s17, %s2311
      $region100: #{_lambda_.1} parent=95 // pred_fallthru
        _
    $region96: #{_lambda_.1} parent=5 // pred_fallthru
      _
  $region6: #{_lambda_.1} parent=0 // loop_footer
    %s27 = sadd.s32 1, %s23
  $region7: #{_lambda_.1} parent=0 // loop_footer_branch
    %22 = sbr.rel target = $region3
  $region8: #{_lambda_.1} parent=0 // loop_exit
    _

</llo_original>
